<compile_context>
chip_gen: v7x
topology: tpu7x:2x2x1
jax: 0.10.0
libtpu: 0.0.40
codegen_flags: <defaults>
</compile_context>

<pallas_src>
import jax
import jax.numpy as jnp
from jax.experimental import pallas as pl
from jax.experimental.pallas import tpu as pltpu

NEG_SLOPE = 0.01   # nn.LeakyReLU(negative_slope=0.01)
LANE = 128         # TPU lane width
SUBLANE = 8        # TPU sublane width
N_BLOCKS = 5       # bb1..bb5


def _leaky_relu(v):
    # For 0 < slope < 1, leaky_relu(v) == max(v, slope*v): mul+max (2 VALU ops).
    return jnp.maximum(v, NEG_SLOPE * v)


def _round_up(x, m):
    return (x + m - 1) // m * m


def residual_network_kernel(
    x_ref,    # (TM, IN_DIM)      bf16 activations (batch tile, UNPADDED feature dim)
    wr_ref,   # (IN_DIM, H_P)     bf16 resize weight (pre-transposed; K unpadded)
    br_ref,   # (1, H_P)          f32 resize bias
    w1_ref,   # (5, H_P, H_P)     bf16 fc1 weights for bb1..bb5
    b1_ref,   # (5, 1, H_P)       f32 fc1 biases
    w2_ref,   # (5, H_P, H_P)     bf16 fc2 weights for bb1..bb5
    b2_ref,   # (5, 1, H_P)       f32 fc2 biases
    wf_ref,   # (H_P, OUT_P)      bf16 final_fc weight (N padded to 128 for MXU)
    bf_ref,   # (1, OUT_P)        f32 final_fc bias
    o_ref,    # (TM, OUT_DIM)     f32 output tile (NARROW: true output_dim)
):
    mxu_dtype = x_ref.dtype   # bf16: MXU inputs only; VPU math stays f32
    out_dim = o_ref.shape[-1]

    # resize: Linear(input_dim -> hidden).  K = true input_dim (MXU takes it).
    out = (
        jnp.dot(x_ref[...], wr_ref[...], preferred_element_type=jnp.float32)
        + br_ref[...]
    )

    # 5 BasicBlocks, statically unrolled (weights stacked along leading axis).
    for i in range(N_BLOCKS):
        identity = out
        h = _leaky_relu(
            jnp.dot(out.astype(mxu_dtype), w1_ref[i],
                    preferred_element_type=jnp.float32)
            + b1_ref[i]
        )
        h = (
            jnp.dot(h.astype(mxu_dtype), w2_ref[i],
                    preferred_element_type=jnp.float32)
            + b2_ref[i]
        )
        out = _leaky_relu(h + identity)

    # final_fc: Linear(hidden -> output_dim) at a clean 128-lane N, then slice
    # in-VMEM and store only the true output_dim columns (narrow HBM write).
    final = (
        jnp.dot(out.astype(mxu_dtype), wf_ref[...],
                preferred_element_type=jnp.float32)
        + bf_ref[...]
    )
    o_ref[...] = final[:, :out_dim].astype(o_ref.dtype)


def init_params(key, input_dim, output_dim, hidden_units=40):
    """PyTorch-Linear-style init: U(-1/sqrt(fan_in), 1/sqrt(fan_in)); f32 logical params."""
    def linear(k, fan_in, fan_out):
        kw, kb = jax.random.split(k)
        bound = 1.0 / jnp.sqrt(jnp.float32(fan_in))
        # stored already transposed: (in, out) so the kernel does y = x @ W + b
        w = jax.random.uniform(kw, (fan_in, fan_out), jnp.float32, -bound, bound)
        b = jax.random.uniform(kb, (1, fan_out), jnp.float32, -bound, bound)
        return w, b

    keys = jax.random.split(key, 12)
    wr, br = linear(keys[0], input_dim, hidden_units)

    w1s, b1s, w2s, b2s = [], [], [], []
    for i in range(N_BLOCKS):
        w1, b1 = linear(keys[1 + 2 * i], hidden_units, hidden_units)
        w2, b2 = linear(keys[2 + 2 * i], hidden_units, hidden_units)
        w1s.append(w1); b1s.append(b1)
        w2s.append(w2); b2s.append(b2)

    wf, bf = linear(keys[11], hidden_units, output_dim)

    return dict(
        wr=wr, br=br,
        w1=jnp.stack(w1s), b1=jnp.stack(b1s),
        w2=jnp.stack(w2s), b2=jnp.stack(b2s),
        wf=wf, bf=bf,
    )


def prepare_params(params, mxu_dtype=jnp.bfloat16):
    """Pad ONLY the hidden/output lane dims to 128 (padded rows/cols/biases are
    zero, and LeakyReLU(0)=0, so padded lanes stay exactly zero end-to-end).
    The resize weight keeps its true K = input_dim (x streams unpadded).
    Weights are cast to bf16 for the MXU; biases stay f32 for the VPU add."""
    def pad_last(w, pad_k_too):
        kp = _round_up(w.shape[-2], LANE) if pad_k_too else w.shape[-2]
        np_ = _round_up(w.shape[-1], LANE)
        pads = [(0, 0)] * (w.ndim - 2) + [(0, kp - w.shape[-2]), (0, np_ - w.shape[-1])]
        return jnp.pad(w, pads).astype(mxu_dtype)

    def pad_b(b):
        np_ = _round_up(b.shape[-1], LANE)
        pads = [(0, 0)] * (b.ndim - 1) + [(0, np_ - b.shape[-1])]
        return jnp.pad(b, pads).astype(jnp.float32)

    return dict(
        wr=pad_last(params["wr"], pad_k_too=False),   # (input_dim, 128) — K unpadded
        br=pad_b(params["br"]),
        w1=pad_last(params["w1"], pad_k_too=True),    # (5, 128, 128)
        b1=pad_b(params["b1"]),
        w2=pad_last(params["w2"], pad_k_too=True),
        b2=pad_b(params["b2"]),
        wf=pad_last(params["wf"], pad_k_too=True),    # (128, 128) — N padded for MXU
        bf=pad_b(params["bf"]),
        input_dim=int(params["wr"].shape[0]),
        output_dim=int(params["wf"].shape[1]),
    )


def residual_network_forward(x, pp, *, batch_tile=2048, core_parallel=False):
    """x: (B, input_dim) f32 or bf16. pp: prepare_params(...) output.
    Returns (B, output_dim) f32."""
    B, input_dim = x.shape
    assert input_dim == pp["input_dim"], "input feature mismatch"

    in_dim = pp["wr"].shape[0]          # true input_dim (unpadded K)
    h_p = pp["wr"].shape[1]             # hidden padded to 128
    out_p = pp["wf"].shape[1]           # 128 (matmul N)
    output_dim = pp["output_dim"]       # narrow HBM output width

    # Batch tile: multiple of 8 sublanes, up to `batch_tile` rows per grid step.
    tm = min(_round_up(batch_tile, SUBLANE), _round_up(B, SUBLANE))
    b_pad = _round_up(B, tm)

    # Stream activations in bf16 (the MXU consumes bf16 anyway); only the batch
    # dim is padded.  If the producer already emits bf16 at a tile-multiple
    # batch, this is a no-op (no extra HBM round trip).
    x_in = x if x.dtype == jnp.bfloat16 else x.astype(jnp.bfloat16)
    if b_pad != B:
        x_in = jnp.pad(x_in, ((0, b_pad - B), (0, 0)))

    grid = (b_pad // tm,)

    # Weights: full-extent blocks pinned to block 0 -> VMEM-resident across all steps.
    def w_spec2(arr):
        return pl.BlockSpec(arr.shape, lambda i: (0, 0))

    def w_spec3(arr):
        return pl.BlockSpec(arr.shape, lambda i: (0, 0, 0))

    flops = 2 * b_pad * (in_dim * h_p + 2 * N_BLOCKS * h_p * h_p + h_p * out_p)
    bytes_accessed = (
        b_pad * in_dim * 2                       # bf16 x stream
        + b_pad * output_dim * 4                 # narrow f32 output
        + sum(pp[k].size * pp[k].dtype.itemsize
              for k in ("wr", "br", "w1", "b1", "w2", "b2", "wf", "bf"))
    )

    # v7x has 2 TensorCores: CORE_PARALLEL shards the batch grid across them.
    # "parallel" is sufficient (and equivalent codegen) on v5e/v6e.
    semantics = (pltpu.CORE_PARALLEL,) if core_parallel else ("parallel",)

    out = pl.pallas_call(
        residual_network_kernel,
        out_shape=jax.ShapeDtypeStruct((b_pad, output_dim), jnp.float32),
        grid=grid,
        in_specs=[
            pl.BlockSpec((tm, in_dim), lambda i: (i, 0)),   # streamed bf16 batch tile
            w_spec2(pp["wr"]), w_spec2(pp["br"]),
            w_spec3(pp["w1"]), w_spec3(pp["b1"]),
            w_spec3(pp["w2"]), w_spec3(pp["b2"]),
            w_spec2(pp["wf"]), w_spec2(pp["bf"]),
        ],
        out_specs=pl.BlockSpec((tm, output_dim), lambda i: (i, 0)),  # narrow store
        compiler_params=pltpu.CompilerParams(
            dimension_semantics=semantics,
            # ~0.5 MiB weights + double-buffered tiles + a few MiB f32 temporaries
            # at TM=2048 -> well under this limit AND under v7x's 64 MiB physical VMEM.
            vmem_limit_bytes=32 * 1024 * 1024,
        ),
        cost_estimate=pl.CostEstimate(
            flops=flops, transcendentals=0, bytes_accessed=bytes_accessed),
    )(x_in, pp["wr"], pp["br"], pp["w1"], pp["b1"],
      pp["w2"], pp["b2"], pp["wf"], pp["bf"])

    # Padded batch rows are sliced off; output columns were never padded in HBM.
    return out[:B]


def reference_forward(x, params, mxu_dtype=jnp.bfloat16):
    """Pure-JAX reference matching the PyTorch module semantics (same bf16 MXU
    inputs / f32 accumulation as the kernel, on unpadded shapes)."""
    def dense(a, w, b):
        return jnp.dot(a.astype(mxu_dtype), w.astype(mxu_dtype),
                       preferred_element_type=jnp.float32) + b

    out = dense(x, params["wr"], params["br"])
    for i in range(N_BLOCKS):
        identity = out
        h = _leaky_relu(dense(out, params["w1"][i], params["b1"][i]))
        h = dense(h, params["w2"][i], params["b2"][i])
        out = _leaky_relu(h + identity)
    return dense(out, params["wf"], params["bf"])


if __name__ == "__main__":
    key = jax.random.PRNGKey(0)
    k_params, k_x, k_x2 = jax.random.split(key, 3)

    batch = 16
    input_dim = 16
    hidden_units = 40
    output_dim = 8

    params = init_params(k_params, input_dim, output_dim, hidden_units)
    pp = prepare_params(params)

    # Small single-tile case.
    x = jax.random.normal(k_x, (batch, input_dim), dtype=jnp.float32)
    out = jax.block_until_ready(residual_network_forward(x, pp))
    ref = reference_forward(x, params)
    assert out.shape == (batch, output_dim)
    assert jnp.allclose(out, ref, atol=2e-3, rtol=2e-3), "mismatch vs reference (small)"

    # Multi-tile case with batch padding (exercises the grid + padded last tile).
    batch2 = 300
    x2 = jax.random.normal(k_x2, (batch2, input_dim), dtype=jnp.float32)
    out2 = jax.block_until_ready(residual_network_forward(x2, pp, batch_tile=128))
    ref2 = reference_forward(x2, params)
    assert out2.shape == (batch2, output_dim)
    assert jnp.allclose(out2, ref2, atol=2e-3, rtol=2e-3), "mismatch vs reference (tiled)"

    print("KERNEL_OK")
</pallas_src>

<mosaic_0001>
module attributes {stable_mosaic.version = 11 : i64} {
  func.func @residual_network_kernel(%arg0: i32, %arg1: memref<16x16xbf16, #tpu.memory_space<vmem>>, %arg2: memref<16x128xbf16, #tpu.memory_space<vmem>>, %arg3: memref<1x128xf32, #tpu.memory_space<vmem>>, %arg4: memref<5x128x128xbf16, #tpu.memory_space<vmem>>, %arg5: memref<5x1x128xf32, #tpu.memory_space<vmem>>, %arg6: memref<5x128x128xbf16, #tpu.memory_space<vmem>>, %arg7: memref<5x1x128xf32, #tpu.memory_space<vmem>>, %arg8: memref<128x128xbf16, #tpu.memory_space<vmem>>, %arg9: memref<1x128xf32, #tpu.memory_space<vmem>>, %arg10: memref<16x8xf32, #tpu.memory_space<vmem>>) attributes {dimension_semantics = [#tpu.dimension_semantics<parallel>], iteration_bounds = array<i64: 1>, scalar_prefetch = 0 : i64, scratch_operands = 0 : i64, tpu.core_type = #tpu.core_type<tc>, window_params = [{transform_indices = @transform_0, window_bounds = array<i64: 16, 16>}, {pipeline_mode = #tpu.pipeline_mode<synchronous>, transform_indices = @transform_1, window_bounds = array<i64: 16, 128>}, {pipeline_mode = #tpu.pipeline_mode<synchronous>, transform_indices = @transform_2, window_bounds = array<i64: 1, 128>}, {pipeline_mode = #tpu.pipeline_mode<synchronous>, transform_indices = @transform_3, window_bounds = array<i64: 5, 128, 128>}, {pipeline_mode = #tpu.pipeline_mode<synchronous>, transform_indices = @transform_4, window_bounds = array<i64: 5, 1, 128>}, {pipeline_mode = #tpu.pipeline_mode<synchronous>, transform_indices = @transform_5, window_bounds = array<i64: 5, 128, 128>}, {pipeline_mode = #tpu.pipeline_mode<synchronous>, transform_indices = @transform_6, window_bounds = array<i64: 5, 1, 128>}, {pipeline_mode = #tpu.pipeline_mode<synchronous>, transform_indices = @transform_7, window_bounds = array<i64: 128, 128>}, {pipeline_mode = #tpu.pipeline_mode<synchronous>, transform_indices = @transform_8, window_bounds = array<i64: 1, 128>}, {transform_indices = @transform_9, window_bounds = array<i64: 16, 8>}]} {
    %c0 = arith.constant 0 : index
    %c0_0 = arith.constant 0 : index
    %0 = vector.load %arg1[%c0, %c0_0] : memref<16x16xbf16, #tpu.memory_space<vmem>>, vector<16x16xbf16>
    %c0_1 = arith.constant 0 : index
    %c0_2 = arith.constant 0 : index
    %1 = vector.load %arg2[%c0_1, %c0_2] : memref<16x128xbf16, #tpu.memory_space<vmem>>, vector<16x128xbf16>
    %cst = arith.constant dense<0.000000e+00> : vector<16x128xf32>
    %2 = tpu.matmul %0, %1, %cst {dimension_numbers = #tpu.dot_dimension_numbers<[1], [0], [0], [1], [0, 0, 1, 1], [], []>} : vector<16x16xbf16>, vector<16x128xbf16>, vector<16x128xf32> -> vector<16x128xf32>
    %c0_3 = arith.constant 0 : index
    %c0_4 = arith.constant 0 : index
    %3 = vector.load %arg3[%c0_3, %c0_4] : memref<1x128xf32, #tpu.memory_space<vmem>>, vector<1x128xf32>
    %4 = vector.broadcast %3 : vector<1x128xf32> to vector<16x128xf32>
    %5 = arith.addf %2, %4 : vector<16x128xf32>
    %6 = arith.truncf %5 : vector<16x128xf32> to vector<16x128xbf16>
    %c0_5 = arith.constant 0 : index
    %c0_6 = arith.constant 0 : index
    %c0_7 = arith.constant 0 : index
    %7 = vector.load %arg4[%c0_5, %c0_6, %c0_7] : memref<5x128x128xbf16, #tpu.memory_space<vmem>>, vector<1x128x128xbf16>
    %8 = vector.shape_cast %7 : vector<1x128x128xbf16> to vector<128x128xbf16>
    %cst_8 = arith.constant dense<0.000000e+00> : vector<16x128xf32>
    %9 = tpu.matmul %6, %8, %cst_8 {dimension_numbers = #tpu.dot_dimension_numbers<[1], [0], [0], [1], [0, 0, 1, 1], [], []>} : vector<16x128xbf16>, vector<128x128xbf16>, vector<16x128xf32> -> vector<16x128xf32>
    %c0_9 = arith.constant 0 : index
    %c0_10 = arith.constant 0 : index
    %c0_11 = arith.constant 0 : index
    %10 = vector.load %arg5[%c0_9, %c0_10, %c0_11] : memref<5x1x128xf32, #tpu.memory_space<vmem>>, vector<1x1x128xf32>
    %11 = vector.shape_cast %10 : vector<1x1x128xf32> to vector<1x128xf32>
    %12 = vector.broadcast %11 : vector<1x128xf32> to vector<16x128xf32>
    %13 = arith.addf %9, %12 : vector<16x128xf32>
    %cst_12 = arith.constant 0.00999999977 : f32
    %14 = vector.broadcast %cst_12 : f32 to vector<16x128xf32>
    %15 = arith.mulf %14, %13 : vector<16x128xf32>
    %16 = arith.maximumf %13, %15 : vector<16x128xf32>
    %17 = arith.truncf %16 : vector<16x128xf32> to vector<16x128xbf16>
    %c0_13 = arith.constant 0 : index
    %c0_14 = arith.constant 0 : index
    %c0_15 = arith.constant 0 : index
    %18 = vector.load %arg6[%c0_13, %c0_14, %c0_15] : memref<5x128x128xbf16, #tpu.memory_space<vmem>>, vector<1x128x128xbf16>
    %19 = vector.shape_cast %18 : vector<1x128x128xbf16> to vector<128x128xbf16>
    %cst_16 = arith.constant dense<0.000000e+00> : vector<16x128xf32>
    %20 = tpu.matmul %17, %19, %cst_16 {dimension_numbers = #tpu.dot_dimension_numbers<[1], [0], [0], [1], [0, 0, 1, 1], [], []>} : vector<16x128xbf16>, vector<128x128xbf16>, vector<16x128xf32> -> vector<16x128xf32>
    %c0_17 = arith.constant 0 : index
    %c0_18 = arith.constant 0 : index
    %c0_19 = arith.constant 0 : index
    %21 = vector.load %arg7[%c0_17, %c0_18, %c0_19] : memref<5x1x128xf32, #tpu.memory_space<vmem>>, vector<1x1x128xf32>
    %22 = vector.shape_cast %21 : vector<1x1x128xf32> to vector<1x128xf32>
    %23 = vector.broadcast %22 : vector<1x128xf32> to vector<16x128xf32>
    %24 = arith.addf %20, %23 : vector<16x128xf32>
    %25 = arith.addf %24, %5 : vector<16x128xf32>
    %cst_20 = arith.constant 0.00999999977 : f32
    %26 = vector.broadcast %cst_20 : f32 to vector<16x128xf32>
    %27 = arith.mulf %26, %25 : vector<16x128xf32>
    %28 = arith.maximumf %25, %27 : vector<16x128xf32>
    %29 = arith.truncf %28 : vector<16x128xf32> to vector<16x128xbf16>
    %c1 = arith.constant 1 : index
    %c0_21 = arith.constant 0 : index
    %c0_22 = arith.constant 0 : index
    %30 = vector.load %arg4[%c1, %c0_21, %c0_22] : memref<5x128x128xbf16, #tpu.memory_space<vmem>>, vector<1x128x128xbf16>
    %31 = vector.shape_cast %30 : vector<1x128x128xbf16> to vector<128x128xbf16>
    %cst_23 = arith.constant dense<0.000000e+00> : vector<16x128xf32>
    %32 = tpu.matmul %29, %31, %cst_23 {dimension_numbers = #tpu.dot_dimension_numbers<[1], [0], [0], [1], [0, 0, 1, 1], [], []>} : vector<16x128xbf16>, vector<128x128xbf16>, vector<16x128xf32> -> vector<16x128xf32>
    %c1_24 = arith.constant 1 : index
    %c0_25 = arith.constant 0 : index
    %c0_26 = arith.constant 0 : index
    %33 = vector.load %arg5[%c1_24, %c0_25, %c0_26] : memref<5x1x128xf32, #tpu.memory_space<vmem>>, vector<1x1x128xf32>
    %34 = vector.shape_cast %33 : vector<1x1x128xf32> to vector<1x128xf32>
    %35 = vector.broadcast %34 : vector<1x128xf32> to vector<16x128xf32>
    %36 = arith.addf %32, %35 : vector<16x128xf32>
    %cst_27 = arith.constant 0.00999999977 : f32
    %37 = vector.broadcast %cst_27 : f32 to vector<16x128xf32>
    %38 = arith.mulf %37, %36 : vector<16x128xf32>
    %39 = arith.maximumf %36, %38 : vector<16x128xf32>
    %40 = arith.truncf %39 : vector<16x128xf32> to vector<16x128xbf16>
    %c1_28 = arith.constant 1 : index
    %c0_29 = arith.constant 0 : index
    %c0_30 = arith.constant 0 : index
    %41 = vector.load %arg6[%c1_28, %c0_29, %c0_30] : memref<5x128x128xbf16, #tpu.memory_space<vmem>>, vector<1x128x128xbf16>
    %42 = vector.shape_cast %41 : vector<1x128x128xbf16> to vector<128x128xbf16>
    %cst_31 = arith.constant dense<0.000000e+00> : vector<16x128xf32>
    %43 = tpu.matmul %40, %42, %cst_31 {dimension_numbers = #tpu.dot_dimension_numbers<[1], [0], [0], [1], [0, 0, 1, 1], [], []>} : vector<16x128xbf16>, vector<128x128xbf16>, vector<16x128xf32> -> vector<16x128xf32>
    %c1_32 = arith.constant 1 : index
    %c0_33 = arith.constant 0 : index
    %c0_34 = arith.constant 0 : index
    %44 = vector.load %arg7[%c1_32, %c0_33, %c0_34] : memref<5x1x128xf32, #tpu.memory_space<vmem>>, vector<1x1x128xf32>
    %45 = vector.shape_cast %44 : vector<1x1x128xf32> to vector<1x128xf32>
    %46 = vector.broadcast %45 : vector<1x128xf32> to vector<16x128xf32>
    %47 = arith.addf %43, %46 : vector<16x128xf32>
    %48 = arith.addf %47, %28 : vector<16x128xf32>
    %cst_35 = arith.constant 0.00999999977 : f32
    %49 = vector.broadcast %cst_35 : f32 to vector<16x128xf32>
    %50 = arith.mulf %49, %48 : vector<16x128xf32>
    %51 = arith.maximumf %48, %50 : vector<16x128xf32>
    %52 = arith.truncf %51 : vector<16x128xf32> to vector<16x128xbf16>
    %c2 = arith.constant 2 : index
    %c0_36 = arith.constant 0 : index
    %c0_37 = arith.constant 0 : index
    %53 = vector.load %arg4[%c2, %c0_36, %c0_37] : memref<5x128x128xbf16, #tpu.memory_space<vmem>>, vector<1x128x128xbf16>
    %54 = vector.shape_cast %53 : vector<1x128x128xbf16> to vector<128x128xbf16>
    %cst_38 = arith.constant dense<0.000000e+00> : vector<16x128xf32>
    %55 = tpu.matmul %52, %54, %cst_38 {dimension_numbers = #tpu.dot_dimension_numbers<[1], [0], [0], [1], [0, 0, 1, 1], [], []>} : vector<16x128xbf16>, vector<128x128xbf16>, vector<16x128xf32> -> vector<16x128xf32>
    %c2_39 = arith.constant 2 : index
    %c0_40 = arith.constant 0 : index
    %c0_41 = arith.constant 0 : index
    %56 = vector.load %arg5[%c2_39, %c0_40, %c0_41] : memref<5x1x128xf32, #tpu.memory_space<vmem>>, vector<1x1x128xf32>
    %57 = vector.shape_cast %56 : vector<1x1x128xf32> to vector<1x128xf32>
    %58 = vector.broadcast %57 : vector<1x128xf32> to vector<16x128xf32>
    %59 = arith.addf %55, %58 : vector<16x128xf32>
    %cst_42 = arith.constant 0.00999999977 : f32
    %60 = vector.broadcast %cst_42 : f32 to vector<16x128xf32>
    %61 = arith.mulf %60, %59 : vector<16x128xf32>
    %62 = arith.maximumf %59, %61 : vector<16x128xf32>
    %63 = arith.truncf %62 : vector<16x128xf32> to vector<16x128xbf16>
    %c2_43 = arith.constant 2 : index
    %c0_44 = arith.constant 0 : index
    %c0_45 = arith.constant 0 : index
    %64 = vector.load %arg6[%c2_43, %c0_44, %c0_45] : memref<5x128x128xbf16, #tpu.memory_space<vmem>>, vector<1x128x128xbf16>
    %65 = vector.shape_cast %64 : vector<1x128x128xbf16> to vector<128x128xbf16>
    %cst_46 = arith.constant dense<0.000000e+00> : vector<16x128xf32>
    %66 = tpu.matmul %63, %65, %cst_46 {dimension_numbers = #tpu.dot_dimension_numbers<[1], [0], [0], [1], [0, 0, 1, 1], [], []>} : vector<16x128xbf16>, vector<128x128xbf16>, vector<16x128xf32> -> vector<16x128xf32>
    %c2_47 = arith.constant 2 : index
    %c0_48 = arith.constant 0 : index
    %c0_49 = arith.constant 0 : index
    %67 = vector.load %arg7[%c2_47, %c0_48, %c0_49] : memref<5x1x128xf32, #tpu.memory_space<vmem>>, vector<1x1x128xf32>
    %68 = vector.shape_cast %67 : vector<1x1x128xf32> to vector<1x128xf32>
    %69 = vector.broadcast %68 : vector<1x128xf32> to vector<16x128xf32>
    %70 = arith.addf %66, %69 : vector<16x128xf32>
    %71 = arith.addf %70, %51 : vector<16x128xf32>
    %cst_50 = arith.constant 0.00999999977 : f32
    %72 = vector.broadcast %cst_50 : f32 to vector<16x128xf32>
    %73 = arith.mulf %72, %71 : vector<16x128xf32>
    %74 = arith.maximumf %71, %73 : vector<16x128xf32>
    %75 = arith.truncf %74 : vector<16x128xf32> to vector<16x128xbf16>
    %c3 = arith.constant 3 : index
    %c0_51 = arith.constant 0 : index
    %c0_52 = arith.constant 0 : index
    %76 = vector.load %arg4[%c3, %c0_51, %c0_52] : memref<5x128x128xbf16, #tpu.memory_space<vmem>>, vector<1x128x128xbf16>
    %77 = vector.shape_cast %76 : vector<1x128x128xbf16> to vector<128x128xbf16>
    %cst_53 = arith.constant dense<0.000000e+00> : vector<16x128xf32>
    %78 = tpu.matmul %75, %77, %cst_53 {dimension_numbers = #tpu.dot_dimension_numbers<[1], [0], [0], [1], [0, 0, 1, 1], [], []>} : vector<16x128xbf16>, vector<128x128xbf16>, vector<16x128xf32> -> vector<16x128xf32>
    %c3_54 = arith.constant 3 : index
    %c0_55 = arith.constant 0 : index
    %c0_56 = arith.constant 0 : index
    %79 = vector.load %arg5[%c3_54, %c0_55, %c0_56] : memref<5x1x128xf32, #tpu.memory_space<vmem>>, vector<1x1x128xf32>
    %80 = vector.shape_cast %79 : vector<1x1x128xf32> to vector<1x128xf32>
    %81 = vector.broadcast %80 : vector<1x128xf32> to vector<16x128xf32>
    %82 = arith.addf %78, %81 : vector<16x128xf32>
    %cst_57 = arith.constant 0.00999999977 : f32
    %83 = vector.broadcast %cst_57 : f32 to vector<16x128xf32>
    %84 = arith.mulf %83, %82 : vector<16x128xf32>
    %85 = arith.maximumf %82, %84 : vector<16x128xf32>
    %86 = arith.truncf %85 : vector<16x128xf32> to vector<16x128xbf16>
    %c3_58 = arith.constant 3 : index
    %c0_59 = arith.constant 0 : index
    %c0_60 = arith.constant 0 : index
    %87 = vector.load %arg6[%c3_58, %c0_59, %c0_60] : memref<5x128x128xbf16, #tpu.memory_space<vmem>>, vector<1x128x128xbf16>
    %88 = vector.shape_cast %87 : vector<1x128x128xbf16> to vector<128x128xbf16>
    %cst_61 = arith.constant dense<0.000000e+00> : vector<16x128xf32>
    %89 = tpu.matmul %86, %88, %cst_61 {dimension_numbers = #tpu.dot_dimension_numbers<[1], [0], [0], [1], [0, 0, 1, 1], [], []>} : vector<16x128xbf16>, vector<128x128xbf16>, vector<16x128xf32> -> vector<16x128xf32>
    %c3_62 = arith.constant 3 : index
    %c0_63 = arith.constant 0 : index
    %c0_64 = arith.constant 0 : index
    %90 = vector.load %arg7[%c3_62, %c0_63, %c0_64] : memref<5x1x128xf32, #tpu.memory_space<vmem>>, vector<1x1x128xf32>
    %91 = vector.shape_cast %90 : vector<1x1x128xf32> to vector<1x128xf32>
    %92 = vector.broadcast %91 : vector<1x128xf32> to vector<16x128xf32>
    %93 = arith.addf %89, %92 : vector<16x128xf32>
    %94 = arith.addf %93, %74 : vector<16x128xf32>
    %cst_65 = arith.constant 0.00999999977 : f32
    %95 = vector.broadcast %cst_65 : f32 to vector<16x128xf32>
    %96 = arith.mulf %95, %94 : vector<16x128xf32>
    %97 = arith.maximumf %94, %96 : vector<16x128xf32>
    %98 = arith.truncf %97 : vector<16x128xf32> to vector<16x128xbf16>
    %c4 = arith.constant 4 : index
    %c0_66 = arith.constant 0 : index
    %c0_67 = arith.constant 0 : index
    %99 = vector.load %arg4[%c4, %c0_66, %c0_67] : memref<5x128x128xbf16, #tpu.memory_space<vmem>>, vector<1x128x128xbf16>
    %100 = vector.shape_cast %99 : vector<1x128x128xbf16> to vector<128x128xbf16>
    %cst_68 = arith.constant dense<0.000000e+00> : vector<16x128xf32>
    %101 = tpu.matmul %98, %100, %cst_68 {dimension_numbers = #tpu.dot_dimension_numbers<[1], [0], [0], [1], [0, 0, 1, 1], [], []>} : vector<16x128xbf16>, vector<128x128xbf16>, vector<16x128xf32> -> vector<16x128xf32>
    %c4_69 = arith.constant 4 : index
    %c0_70 = arith.constant 0 : index
    %c0_71 = arith.constant 0 : index
    %102 = vector.load %arg5[%c4_69, %c0_70, %c0_71] : memref<5x1x128xf32, #tpu.memory_space<vmem>>, vector<1x1x128xf32>
    %103 = vector.shape_cast %102 : vector<1x1x128xf32> to vector<1x128xf32>
    %104 = vector.broadcast %103 : vector<1x128xf32> to vector<16x128xf32>
    %105 = arith.addf %101, %104 : vector<16x128xf32>
    %cst_72 = arith.constant 0.00999999977 : f32
    %106 = vector.broadcast %cst_72 : f32 to vector<16x128xf32>
    %107 = arith.mulf %106, %105 : vector<16x128xf32>
    %108 = arith.maximumf %105, %107 : vector<16x128xf32>
    %109 = arith.truncf %108 : vector<16x128xf32> to vector<16x128xbf16>
    %c4_73 = arith.constant 4 : index
    %c0_74 = arith.constant 0 : index
    %c0_75 = arith.constant 0 : index
    %110 = vector.load %arg6[%c4_73, %c0_74, %c0_75] : memref<5x128x128xbf16, #tpu.memory_space<vmem>>, vector<1x128x128xbf16>
    %111 = vector.shape_cast %110 : vector<1x128x128xbf16> to vector<128x128xbf16>
    %cst_76 = arith.constant dense<0.000000e+00> : vector<16x128xf32>
    %112 = tpu.matmul %109, %111, %cst_76 {dimension_numbers = #tpu.dot_dimension_numbers<[1], [0], [0], [1], [0, 0, 1, 1], [], []>} : vector<16x128xbf16>, vector<128x128xbf16>, vector<16x128xf32> -> vector<16x128xf32>
    %c4_77 = arith.constant 4 : index
    %c0_78 = arith.constant 0 : index
    %c0_79 = arith.constant 0 : index
    %113 = vector.load %arg7[%c4_77, %c0_78, %c0_79] : memref<5x1x128xf32, #tpu.memory_space<vmem>>, vector<1x1x128xf32>
    %114 = vector.shape_cast %113 : vector<1x1x128xf32> to vector<1x128xf32>
    %115 = vector.broadcast %114 : vector<1x128xf32> to vector<16x128xf32>
    %116 = arith.addf %112, %115 : vector<16x128xf32>
    %117 = arith.addf %116, %97 : vector<16x128xf32>
    %cst_80 = arith.constant 0.00999999977 : f32
    %118 = vector.broadcast %cst_80 : f32 to vector<16x128xf32>
    %119 = arith.mulf %118, %117 : vector<16x128xf32>
    %120 = arith.maximumf %117, %119 : vector<16x128xf32>
    %121 = arith.truncf %120 : vector<16x128xf32> to vector<16x128xbf16>
    %c0_81 = arith.constant 0 : index
    %c0_82 = arith.constant 0 : index
    %122 = vector.load %arg8[%c0_81, %c0_82] : memref<128x128xbf16, #tpu.memory_space<vmem>>, vector<128x128xbf16>
    %cst_83 = arith.constant dense<0.000000e+00> : vector<16x128xf32>
    %123 = tpu.matmul %121, %122, %cst_83 {dimension_numbers = #tpu.dot_dimension_numbers<[1], [0], [0], [1], [0, 0, 1, 1], [], []>} : vector<16x128xbf16>, vector<128x128xbf16>, vector<16x128xf32> -> vector<16x128xf32>
    %c0_84 = arith.constant 0 : index
    %c0_85 = arith.constant 0 : index
    %124 = vector.load %arg9[%c0_84, %c0_85] : memref<1x128xf32, #tpu.memory_space<vmem>>, vector<1x128xf32>
    %125 = vector.broadcast %124 : vector<1x128xf32> to vector<16x128xf32>
    %126 = arith.addf %123, %125 : vector<16x128xf32>
    %127 = vector.extract_strided_slice %126 {offsets = [0, 0], sizes = [16, 8], strides = [1, 1]} : vector<16x128xf32> to vector<16x8xf32>
    %c0_86 = arith.constant 0 : index
    %c0_87 = arith.constant 0 : index
    %128 = vector.load %arg10[%c0_86, %c0_87] : memref<16x8xf32, #tpu.memory_space<vmem>>, vector<16x8xf32>
    tpu.vector_store %arg10[%c0_86, %c0_87], %127 {strides = array<i32>} : memref<16x8xf32, #tpu.memory_space<vmem>>, vector<16x8xf32>,
    return
  }
  func.func @transform_0(%arg0: i32) -> (i32, i32) {
    %c0_i32 = arith.constant 0 : i32
    %c0_i32_0 = arith.constant 0 : i32
    return %arg0, %c0_i32 : i32, i32
  }
  func.func @transform_1(%arg0: i32) -> (i32, i32) {
    %c0_i32 = arith.constant 0 : i32
    %c0_i32_0 = arith.constant 0 : i32
    %c0_i32_1 = arith.constant 0 : i32
    return %c0_i32, %c0_i32_0 : i32, i32
  }
  func.func @transform_2(%arg0: i32) -> (i32, i32) {
    %c0_i32 = arith.constant 0 : i32
    %c0_i32_0 = arith.constant 0 : i32
    %c0_i32_1 = arith.constant 0 : i32
    return %c0_i32, %c0_i32_0 : i32, i32
  }
  func.func @transform_3(%arg0: i32) -> (i32, i32, i32) {
    %c0_i32 = arith.constant 0 : i32
    %c0_i32_0 = arith.constant 0 : i32
    %c0_i32_1 = arith.constant 0 : i32
    %c0_i32_2 = arith.constant 0 : i32
    return %c0_i32, %c0_i32_0, %c0_i32_1 : i32, i32, i32
  }
  func.func @transform_4(%arg0: i32) -> (i32, i32, i32) {
    %c0_i32 = arith.constant 0 : i32
    %c0_i32_0 = arith.constant 0 : i32
    %c0_i32_1 = arith.constant 0 : i32
    %c0_i32_2 = arith.constant 0 : i32
    return %c0_i32, %c0_i32_0, %c0_i32_1 : i32, i32, i32
  }
  func.func @transform_5(%arg0: i32) -> (i32, i32, i32) {
    %c0_i32 = arith.constant 0 : i32
    %c0_i32_0 = arith.constant 0 : i32
    %c0_i32_1 = arith.constant 0 : i32
    %c0_i32_2 = arith.constant 0 : i32
    return %c0_i32, %c0_i32_0, %c0_i32_1 : i32, i32, i32
  }
  func.func @transform_6(%arg0: i32) -> (i32, i32, i32) {
    %c0_i32 = arith.constant 0 : i32
    %c0_i32_0 = arith.constant 0 : i32
    %c0_i32_1 = arith.constant 0 : i32
    %c0_i32_2 = arith.constant 0 : i32
    return %c0_i32, %c0_i32_0, %c0_i32_1 : i32, i32, i32
  }
  func.func @transform_7(%arg0: i32) -> (i32, i32) {
    %c0_i32 = arith.constant 0 : i32
    %c0_i32_0 = arith.constant 0 : i32
    %c0_i32_1 = arith.constant 0 : i32
    return %c0_i32, %c0_i32_0 : i32, i32
  }
  func.func @transform_8(%arg0: i32) -> (i32, i32) {
    %c0_i32 = arith.constant 0 : i32
    %c0_i32_0 = arith.constant 0 : i32
    %c0_i32_1 = arith.constant 0 : i32
    return %c0_i32, %c0_i32_0 : i32, i32
  }
  func.func @transform_9(%arg0: i32) -> (i32, i32) {
    %c0_i32 = arith.constant 0 : i32
    %c0_i32_0 = arith.constant 0 : i32
    return %arg0, %c0_i32 : i32, i32
  }
}

</mosaic_0001>

<llo_original>
// kernel: tpu_custom_call.1
$region0: #{tpu_custom_call.1}
  #allocation0 [shape = 'u32[]', space=smem, size = 0x4, offset = 0x4, fixed_abs, tag = 'smem constant byte address 0x4 - core index']
  #allocation1 [shape = 'u32[144,128]{1,0:T(1,128)}', space=vmem, size = 0x12000, scoped, tag = 'internal scratch']
  %s0 = inlined_call_operand.hbm [shape: bf16[16,16], index: 0, kind: input, shape index: {}]
  %s1 = inlined_call_operand.hbm [shape: bf16[16,128], index: 1, kind: input, shape index: {}]
  %s2 = inlined_call_operand.vmem [shape: f32[1,128], index: 2, kind: input, shape index: {}]
  %s3 = inlined_call_operand.hbm [shape: bf16[5,128,128], index: 3, kind: input, shape index: {}]
  %s4 = inlined_call_operand.vmem [shape: f32[5,1,128], index: 4, kind: input, shape index: {}]
  %s5 = inlined_call_operand.hbm [shape: bf16[5,128,128], index: 5, kind: input, shape index: {}]
  %s6 = inlined_call_operand.vmem [shape: f32[5,1,128], index: 6, kind: input, shape index: {}]
  %s7 = inlined_call_operand.hbm [shape: bf16[128,128], index: 7, kind: input, shape index: {}]
  %s8 = inlined_call_operand.vmem [shape: f32[1,128], index: 8, kind: input, shape index: {}]
  %s9 = inlined_call_operand.vmem [shape: f32[16,8], index: 9, kind: output, shape index: {}]
  %s10 = sld [smem:[#allocation0]]
  $region66: #{tpu_custom_call.1} parent=0
    _
  %s12 = ssub.s32 1, %s10
  %s13 = scalar_select 0, %s12, %s10
  $region1: #{tpu_custom_call.1} parent=0
    #allocation2 [shape = 'u8[4096]{0}', space=vmem, size = 0x1000, scoped, tag = 'input window, operand 0, single buffered']
    #allocation3 [shape = 's32[1]{0}', space=sflag, size = 0x4, scoped, tag = 'scoped memory for tpu_custom_call.1']
    #allocation4 [shape = 'u8[4096]{0}', space=vmem, size = 0x1000, scoped, tag = 'input window, operand 1, single buffered']
    #allocation5 [shape = 's32[1]{0}', space=sflag, size = 0x4, scoped, tag = 'scoped memory for tpu_custom_call.1']
    #allocation6 [shape = 'u8[163840]{0}', space=vmem, size = 0x28000, scoped, tag = 'input window, operand 3, single buffered']
    #allocation7 [shape = 'u8[163840]{0}', space=vmem, size = 0x28000, scoped, tag = 'input window, operand 5, single buffered']
    #allocation8 [shape = 's32[1]{0}', space=sflag, size = 0x4, scoped, tag = 'scoped memory for tpu_custom_call.1']
    #allocation9 [shape = 'u8[32768]{0}', space=vmem, size = 0x8000, scoped, tag = 'input window, operand 7, single buffered']
    %14 = vsyncpa [#allocation3], 0
    %15 = vsyncpa [#allocation5], 0
    %16 = vsyncpa [#allocation8], 0
    // Predicated region
    $region2: #{tpu_custom_call.1} parent=1 // pred_check
      _
    $region3: #{tpu_custom_call.1} parent=1 // pred_check_branch
      %18 = sbr.rel (0) target = $region5
    $region4: #{tpu_custom_call.1} parent=1 // pred_region
      %s20 = ssub.s32 128, 128
      %21 = vsyncadd [#allocation3], %s20
      %s22 = sshll.u32 [#allocation2], 4
      %s23 = int_to_ptr.vmem [resolvable:$true] %s22
      %28 = dma.hbm_to_vmem [thread:$0]  %s0, 128, %s23, [#allocation3], 64, 64, 4
    $region5: #{tpu_custom_call.1} parent=1 // pred_fallthru
      _
    // Predicated region
    $region6: #{tpu_custom_call.1} parent=1 // pred_check
      _
    $region7: #{tpu_custom_call.1} parent=1 // pred_check_branch
      %30 = sbr.rel (0) target = $region9
    $region8: #{tpu_custom_call.1} parent=1 // pred_region
      %s32 = ssub.s32 128, 128
      %33 = vsyncadd [#allocation5], %s32
      %s34 = sshll.u32 [#allocation4], 4
      %s35 = int_to_ptr.vmem [resolvable:$true] %s34
      %40 = dma.hbm_to_vmem [thread:$0]  %s1, 128, %s35, [#allocation5], 64, 64, 4
    $region9: #{tpu_custom_call.1} parent=1 // pred_fallthru
      _
    // Predicated region
    $region10: #{tpu_custom_call.1} parent=1 // pred_check
      _
    $region11: #{tpu_custom_call.1} parent=1 // pred_check_branch
      %42 = sbr.rel (0) target = $region13
    $region12: #{tpu_custom_call.1} parent=1 // pred_region
      _
    $region13: #{tpu_custom_call.1} parent=1 // pred_fallthru
      _
    // Predicated region
    $region14: #{tpu_custom_call.1} parent=1 // pred_check
      _
    $region15: #{tpu_custom_call.1} parent=1 // pred_check_branch
      %44 = sbr.rel (0) target = $region17
    $region16: #{tpu_custom_call.1} parent=1 // pred_region
      %s46 = ssub.s32 5120, 5120
      %47 = vsyncadd [#allocation5], %s46
      %s48 = sshll.u32 [#allocation6], 4
      %s49 = int_to_ptr.vmem [resolvable:$true] %s48
      %54 = dma.hbm_to_vmem [thread:$0]  %s3, 5120, %s49, [#allocation5], 64, 64, 4
    $region17: #{tpu_custom_call.1} parent=1 // pred_fallthru
      _
    // Predicated region
    $region18: #{tpu_custom_call.1} parent=1 // pred_check
      _
    $region19: #{tpu_custom_call.1} parent=1 // pred_check_branch
      %56 = sbr.rel (0) target = $region21
    $region20: #{tpu_custom_call.1} parent=1 // pred_region
      _
    $region21: #{tpu_custom_call.1} parent=1 // pred_fallthru
      _
    // Predicated region
    $region22: #{tpu_custom_call.1} parent=1 // pred_check
      _
    $region23: #{tpu_custom_call.1} parent=1 // pred_check_branch
      %58 = sbr.rel (0) target = $region25
    $region24: #{tpu_custom_call.1} parent=1 // pred_region
      %s60 = ssub.s32 5120, 5120
      %61 = vsyncadd [#allocation8], %s60
      %s62 = sshll.u32 [#allocation7], 4
      %s63 = int_to_ptr.vmem [resolvable:$true] %s62
      %68 = dma.hbm_to_vmem [thread:$0]  %s5, 5120, %s63, [#allocation8], 64, 64, 4
    $region25: #{tpu_custom_call.1} parent=1 // pred_fallthru
      _
    // Predicated region
    $region26: #{tpu_custom_call.1} parent=1 // pred_check
      _
    $region27: #{tpu_custom_call.1} parent=1 // pred_check_branch
      %70 = sbr.rel (0) target = $region29
    $region28: #{tpu_custom_call.1} parent=1 // pred_region
      _
    $region29: #{tpu_custom_call.1} parent=1 // pred_fallthru
      _
    // Predicated region
    $region30: #{tpu_custom_call.1} parent=1 // pred_check
      _
    $region31: #{tpu_custom_call.1} parent=1 // pred_check_branch
      %72 = sbr.rel (0) target = $region33
    $region32: #{tpu_custom_call.1} parent=1 // pred_region
      %s74 = ssub.s32 1024, 1024
      %75 = vsyncadd [#allocation8], %s74
      %s76 = sshll.u32 [#allocation9], 4
      %s77 = int_to_ptr.vmem [resolvable:$true] %s76
      %82 = dma.hbm_to_vmem [thread:$0]  %s7, 1024, %s77, [#allocation8], 64, 64, 4
    $region33: #{tpu_custom_call.1} parent=1 // pred_fallthru
      _
    // Predicated region
    $region34: #{tpu_custom_call.1} parent=1 // pred_check
      _
    $region35: #{tpu_custom_call.1} parent=1 // pred_check_branch
      %84 = sbr.rel (0) target = $region37
    $region36: #{tpu_custom_call.1} parent=1 // pred_region
      _
    $region37: #{tpu_custom_call.1} parent=1 // pred_fallthru
      _
    // Predicated region
    $region38: #{tpu_custom_call.1} parent=1 // pred_check
      _
    $region39: #{tpu_custom_call.1} parent=1 // pred_check_branch
      %86 = sbr.rel (0) target = $region41
    $region40: #{tpu_custom_call.1} parent=1 // pred_region
      %87 = dma.done [#allocation3], 128
    $region41: #{tpu_custom_call.1} parent=1 // pred_fallthru
      _
    // Predicated region
    $region42: #{tpu_custom_call.1} parent=1 // pred_check
      _
    $region43: #{tpu_custom_call.1} parent=1 // pred_check_branch
      %89 = sbr.rel (0) target = $region45
    $region44: #{tpu_custom_call.1} parent=1 // pred_region
      %90 = dma.done [#allocation5], 128
    $region45: #{tpu_custom_call.1} parent=1 // pred_fallthru
      _
    // Predicated region
    $region46: #{tpu_custom_call.1} parent=1 // pred_check
      _
    $region47: #{tpu_custom_call.1} parent=1 // pred_check_branch
      %92 = sbr.rel (0) target = $region49
    $region48: #{tpu_custom_call.1} parent=1 // pred_region
      %93 = dma.done [#allocation5], 5120
    $region49: #{tpu_custom_call.1} parent=1 // pred_fallthru
      _
    // Predicated region
    $region50: #{tpu_custom_call.1} parent=1 // pred_check
      _
    $region51: #{tpu_custom_call.1} parent=1 // pred_check_branch
      %95 = sbr.rel (0) target = $region53
    $region52: #{tpu_custom_call.1} parent=1 // pred_region
      %96 = dma.done [#allocation8], 5120
    $region53: #{tpu_custom_call.1} parent=1 // pred_fallthru
      _
    // Predicated region
    $region54: #{tpu_custom_call.1} parent=1 // pred_check
      _
    $region55: #{tpu_custom_call.1} parent=1 // pred_check_branch
      %98 = sbr.rel (0) target = $region57
    $region56: #{tpu_custom_call.1} parent=1 // pred_region
      %99 = dma.done [#allocation8], 1024
    $region57: #{tpu_custom_call.1} parent=1 // pred_fallthru
      _
    %v101 = vld [vmem:[#allocation2] sm:$0xf]
    %v102 = vld [vmem:[#allocation2 + $0x4] sm:$0xf]
    %v103 = vld [vmem:[#allocation4] sm:$0xf]
    %v104 = vld [vmem:[#allocation4 + $0x4] sm:$0xf]
    %v105 = vld [vmem:[%s2] sm:$0x1]
    %v107 = vlaneseq
    %v108 = vshrl.u32 %v107, 7
    %v109 = vsub.s32 0, %v108
    %v110 = vrot.slane %v105, %v109
    %v114 = vunpack.c.l.b16 %v101
    %v115 = vunpack.c.l.b16 %v102
    %v116 = vpack.c.b16 %v115, %v114
    %v119 = vunpack.c.l.b16 %v103
    %v120 = vunpack.c.l.b16 %v104
    %v121 = vpack.c.b16 %v120, %v119
    %vm123 = vcmask 130048
    %v125 = vsel %vm123, %v116, 0
    %127 = vmatprep.subr.bf16.mxu0 0
    %128 = vmatpush1.bf16.msra.mxu0 %v121
    %129 = vmatprep.subr.bf16.mxu0 0
    %130 = vmatpush1.bf16.msra.mxu0 0
    %131 = vmatprep.subr.bf16.mxu0 0
    %132 = vmatpush1.bf16.msra.mxu0 0
    %133 = vmatprep.subr.bf16.mxu0 0
    %134 = vmatpush1.bf16.msra.mxu0 0
    %135 = vmatprep.subr.bf16.mxu0 0
    %136 = vmatpush1.bf16.msra.mxu0 0
    %137 = vmatprep.subr.bf16.mxu0 0
    %138 = vmatpush1.bf16.msra.mxu0 0
    %139 = vmatprep.subr.bf16.mxu0 0
    %140 = vmatpush1.bf16.msra.mxu0 0
    %141 = vmatprep.subr.bf16.mxu0 0
    %142 = vmatpush1.bf16.msra.mxu0 0
    %143 = vmatprep.subr.bf16.mxu0 0
    %144 = vmatpush1.bf16.msra.mxu0 0
    %145 = vmatprep.subr.bf16.mxu0 0
    %146 = vmatpush1.bf16.msra.mxu0 0
    %147 = vmatprep.subr.bf16.mxu0 0
    %148 = vmatpush1.bf16.msra.mxu0 0
    %149 = vmatprep.subr.bf16.mxu0 0
    %150 = vmatpush1.bf16.msra.mxu0 0
    %151 = vmatprep.subr.bf16.mxu0 0
    %152 = vmatpush1.bf16.msra.mxu0 0
    %153 = vmatprep.subr.bf16.mxu0 0
    %154 = vmatpush1.bf16.msra.mxu0 0
    %155 = vmatprep.subr.bf16.mxu0 0
    %156 = vmatpush1.bf16.msra.mxu0 0
    %157 = vmatprep.subr.bf16.mxu0 0
    %158 = vmatpush1.bf16.msra.mxu0 0
    %159 = vmatprep.mubr.bf16.mxu0 0
    %160 = vmatmul.mubr.bf16.gmra.mrb[0].mxu0 %v125
    %v161 = vpop.f32.mrb[0].mxu0
    %v162 = vadd.f32 %v110, %v161
    %v163 = vpop.f32.mrb[0].mxu0
    %v164 = vpop.f32.mrb[0].mxu0
    %v165 = vadd.f32 %v110, %v164
    %v166 = vpop.f32.mrb[0].mxu0
    %167 = vdwg.mxu0
    %v168 = vpack.c.bf16 %v165, %v162
    %v169 = vld [vmem:[#allocation6] sm:$0xf]
    %v170 = vld [vmem:[#allocation6 + $0x4] sm:$0xf]
    %v171 = vld [vmem:[#allocation6 + $0x8] sm:$0xf]
    %v172 = vld [vmem:[#allocation6 + $0xc] sm:$0xf]
    %v173 = vld [vmem:[#allocation6 + $0x10] sm:$0xf]
    %v174 = vld [vmem:[#allocation6 + $0x14] sm:$0xf]
    %v175 = vld [vmem:[#allocation6 + $0x18] sm:$0xf]
    %v176 = vld [vmem:[#allocation6 + $0x1c] sm:$0xf]
    %v177 = vld [vmem:[#allocation6 + $0x20] sm:$0xf]
    %v178 = vld [vmem:[#allocation6 + $0x24] sm:$0xf]
    %v179 = vld [vmem:[#allocation6 + $0x28] sm:$0xf]
    %v180 = vld [vmem:[#allocation6 + $0x2c] sm:$0xf]
    %v181 = vld [vmem:[#allocation6 + $0x30] sm:$0xf]
    %v182 = vld [vmem:[#allocation6 + $0x34] sm:$0xf]
    %v183 = vld [vmem:[#allocation6 + $0x38] sm:$0xf]
    %v184 = vld [vmem:[#allocation6 + $0x3c] sm:$0xf]
    %v185 = vld [vmem:[%s4] sm:$0x1]
    %v187 = vlaneseq
    %v188 = vshrl.u32 %v187, 7
    %v189 = vsub.s32 0, %v188
    %v190 = vrot.slane %v185, %v189
    %v208 = vunpack.c.l.b16 %v169
    %v209 = vunpack.c.l.b16 %v170
    %v210 = vunpack.c.l.b16 %v171
    %v211 = vunpack.c.l.b16 %v172
    %v212 = vunpack.c.l.b16 %v173
    %v213 = vunpack.c.l.b16 %v174
    %v214 = vunpack.c.l.b16 %v175
    %v215 = vunpack.c.l.b16 %v176
    %v216 = vunpack.c.l.b16 %v177
    %v217 = vunpack.c.l.b16 %v178
    %v218 = vunpack.c.l.b16 %v179
    %v219 = vunpack.c.l.b16 %v180
    %v220 = vunpack.c.l.b16 %v181
    %v221 = vunpack.c.l.b16 %v182
    %v222 = vunpack.c.l.b16 %v183
    %v223 = vunpack.c.l.b16 %v184
    %v224 = vpack.c.b16 %v209, %v208
    %v225 = vpack.c.b16 %v211, %v210
    %v226 = vpack.c.b16 %v213, %v212
    %v227 = vpack.c.b16 %v215, %v214
    %v228 = vpack.c.b16 %v217, %v216
    %v229 = vpack.c.b16 %v219, %v218
    %v230 = vpack.c.b16 %v221, %v220
    %v231 = vpack.c.b16 %v223, %v222
    %240 = vmatprep.subr.bf16.mxu0 0
    %241 = vmatpush1.bf16.msra.mxu0 %v224
    %242 = vmatprep.subr.bf16.mxu0 0
    %243 = vmatpush1.bf16.msra.mxu0 %v225
    %244 = vmatprep.subr.bf16.mxu0 0
    %245 = vmatpush1.bf16.msra.mxu0 %v226
    %246 = vmatprep.subr.bf16.mxu0 0
    %247 = vmatpush1.bf16.msra.mxu0 %v227
    %248 = vmatprep.subr.bf16.mxu0 0
    %249 = vmatpush1.bf16.msra.mxu0 %v228
    %250 = vmatprep.subr.bf16.mxu0 0
    %251 = vmatpush1.bf16.msra.mxu0 %v229
    %252 = vmatprep.subr.bf16.mxu0 0
    %253 = vmatpush1.bf16.msra.mxu0 %v230
    %254 = vmatprep.subr.bf16.mxu0 0
    %255 = vmatpush1.bf16.msra.mxu0 %v231
    %256 = vmatprep.subr.bf16.mxu0 0
    %257 = vmatpush1.bf16.msra.mxu0 0
    %258 = vmatprep.subr.bf16.mxu0 0
    %259 = vmatpush1.bf16.msra.mxu0 0
    %260 = vmatprep.subr.bf16.mxu0 0
    %261 = vmatpush1.bf16.msra.mxu0 0
    %262 = vmatprep.subr.bf16.mxu0 0
    %263 = vmatpush1.bf16.msra.mxu0 0
    %264 = vmatprep.subr.bf16.mxu0 0
    %265 = vmatpush1.bf16.msra.mxu0 0
    %266 = vmatprep.subr.bf16.mxu0 0
    %267 = vmatpush1.bf16.msra.mxu0 0
    %268 = vmatprep.subr.bf16.mxu0 0
    %269 = vmatpush1.bf16.msra.mxu0 0
    %270 = vmatprep.subr.bf16.mxu0 0
    %271 = vmatpush1.bf16.msra.mxu0 0
    %272 = vmatprep.mubr.bf16.mxu0 0
    %273 = vmatmul.mubr.bf16.gmra.mrb[0].mxu0 %v168
    %v274 = vpop.f32.mrb[0].mxu0
    %v275 = vadd.f32 %v190, %v274
    %v276 = vpop.f32.mrb[0].mxu0
    %v277 = vpop.f32.mrb[0].mxu0
    %v278 = vadd.f32 %v190, %v277
    %v279 = vpop.f32.mrb[0].mxu0
    %280 = vdwg.mxu0
    %v281 = vmul.f32 %v275, 0.01
    %v282 = vmul.f32 %v278, 0.01
    %v283 = vmax.f32 %v275, %v281
    %v284 = vmax.f32 %v278, %v282
    %v285 = vpack.c.bf16 %v284, %v283
    %v286 = vld [vmem:[#allocation7] sm:$0xf]
    %v287 = vld [vmem:[#allocation7 + $0x4] sm:$0xf]
    %v288 = vld [vmem:[#allocation7 + $0x8] sm:$0xf]
    %v289 = vld [vmem:[#allocation7 + $0xc] sm:$0xf]
    %v290 = vld [vmem:[#allocation7 + $0x10] sm:$0xf]
    %v291 = vld [vmem:[#allocation7 + $0x14] sm:$0xf]
    %v292 = vld [vmem:[#allocation7 + $0x18] sm:$0xf]
    %v293 = vld [vmem:[#allocation7 + $0x1c] sm:$0xf]
    %v294 = vld [vmem:[#allocation7 + $0x20] sm:$0xf]
    %v295 = vld [vmem:[#allocation7 + $0x24] sm:$0xf]
    %v296 = vld [vmem:[#allocation7 + $0x28] sm:$0xf]
    %v297 = vld [vmem:[#allocation7 + $0x2c] sm:$0xf]
    %v298 = vld [vmem:[#allocation7 + $0x30] sm:$0xf]
    %v299 = vld [vmem:[#allocation7 + $0x34] sm:$0xf]
    %v300 = vld [vmem:[#allocation7 + $0x38] sm:$0xf]
    %v301 = vld [vmem:[#allocation7 + $0x3c] sm:$0xf]
    %v302 = vld [vmem:[%s6] sm:$0x1]
    %v304 = vlaneseq
    %v305 = vshrl.u32 %v304, 7
    %v306 = vsub.s32 0, %v305
    %v307 = vrot.slane %v302, %v306
    %v325 = vunpack.c.l.b16 %v286
    %v326 = vunpack.c.l.b16 %v287
    %v327 = vunpack.c.l.b16 %v288
    %v328 = vunpack.c.l.b16 %v289
    %v329 = vunpack.c.l.b16 %v290
    %v330 = vunpack.c.l.b16 %v291
    %v331 = vunpack.c.l.b16 %v292
    %v332 = vunpack.c.l.b16 %v293
    %v333 = vunpack.c.l.b16 %v294
    %v334 = vunpack.c.l.b16 %v295
    %v335 = vunpack.c.l.b16 %v296
    %v336 = vunpack.c.l.b16 %v297
    %v337 = vunpack.c.l.b16 %v298
    %v338 = vunpack.c.l.b16 %v299
    %v339 = vunpack.c.l.b16 %v300
    %v340 = vunpack.c.l.b16 %v301
    %v341 = vpack.c.b16 %v326, %v325
    %v342 = vpack.c.b16 %v328, %v327
    %v343 = vpack.c.b16 %v330, %v329
    %v344 = vpack.c.b16 %v332, %v331
    %v345 = vpack.c.b16 %v334, %v333
    %v346 = vpack.c.b16 %v336, %v335
    %v347 = vpack.c.b16 %v338, %v337
    %v348 = vpack.c.b16 %v340, %v339
    %357 = vmatprep.subr.bf16.mxu0 0
    %358 = vmatpush1.bf16.msra.mxu0 %v341
    %359 = vmatprep.subr.bf16.mxu0 0
    %360 = vmatpush1.bf16.msra.mxu0 %v342
    %361 = vmatprep.subr.bf16.mxu0 0
    %362 = vmatpush1.bf16.msra.mxu0 %v343
    %363 = vmatprep.subr.bf16.mxu0 0
    %364 = vmatpush1.bf16.msra.mxu0 %v344
    %365 = vmatprep.subr.bf16.mxu0 0
    %366 = vmatpush1.bf16.msra.mxu0 %v345
    %367 = vmatprep.subr.bf16.mxu0 0
    %368 = vmatpush1.bf16.msra.mxu0 %v346
    %369 = vmatprep.subr.bf16.mxu0 0
    %370 = vmatpush1.bf16.msra.mxu0 %v347
    %371 = vmatprep.subr.bf16.mxu0 0
    %372 = vmatpush1.bf16.msra.mxu0 %v348
    %373 = vmatprep.subr.bf16.mxu0 0
    %374 = vmatpush1.bf16.msra.mxu0 0
    %375 = vmatprep.subr.bf16.mxu0 0
    %376 = vmatpush1.bf16.msra.mxu0 0
    %377 = vmatprep.subr.bf16.mxu0 0
    %378 = vmatpush1.bf16.msra.mxu0 0
    %379 = vmatprep.subr.bf16.mxu0 0
    %380 = vmatpush1.bf16.msra.mxu0 0
    %381 = vmatprep.subr.bf16.mxu0 0
    %382 = vmatpush1.bf16.msra.mxu0 0
    %383 = vmatprep.subr.bf16.mxu0 0
    %384 = vmatpush1.bf16.msra.mxu0 0
    %385 = vmatprep.subr.bf16.mxu0 0
    %386 = vmatpush1.bf16.msra.mxu0 0
    %387 = vmatprep.subr.bf16.mxu0 0
    %388 = vmatpush1.bf16.msra.mxu0 0
    %389 = vmatprep.mubr.bf16.mxu0 0
    %390 = vmatmul.mubr.bf16.gmra.mrb[0].mxu0 %v285
    %v391 = vpop.f32.mrb[0].mxu0
    %v392 = vadd.f32 %v307, %v391
    %v393 = vpop.f32.mrb[0].mxu0
    %v394 = vpop.f32.mrb[0].mxu0
    %v395 = vadd.f32 %v307, %v394
    %v396 = vpop.f32.mrb[0].mxu0
    %397 = vdwg.mxu0
    %v398 = vadd.f32 %v392, %v162
    %v399 = vadd.f32 %v395, %v165
    %v400 = vmul.f32 %v398, 0.01
    %v401 = vmul.f32 %v399, 0.01
    %v402 = vmax.f32 %v398, %v400
    %v403 = vmax.f32 %v399, %v401
    %v404 = vpack.c.bf16 %v403, %v402
    %s405 = scalar_lea.vmem [#allocation6], 64
    %v406 = vld [vmem:[%s405] sm:$0xf]
    %v407 = vld [vmem:[%s405 + $0x4] sm:$0xf]
    %v408 = vld [vmem:[%s405 + $0x8] sm:$0xf]
    %v409 = vld [vmem:[%s405 + $0xc] sm:$0xf]
    %v410 = vld [vmem:[%s405 + $0x10] sm:$0xf]
    %v411 = vld [vmem:[%s405 + $0x14] sm:$0xf]
    %v412 = vld [vmem:[%s405 + $0x18] sm:$0xf]
    %v413 = vld [vmem:[%s405 + $0x1c] sm:$0xf]
    %v414 = vld [vmem:[%s405 + $0x20] sm:$0xf]
    %v415 = vld [vmem:[%s405 + $0x24] sm:$0xf]
    %v416 = vld [vmem:[%s405 + $0x28] sm:$0xf]
    %v417 = vld [vmem:[%s405 + $0x2c] sm:$0xf]
    %v418 = vld [vmem:[%s405 + $0x30] sm:$0xf]
    %v419 = vld [vmem:[%s405 + $0x34] sm:$0xf]
    %v420 = vld [vmem:[%s405 + $0x38] sm:$0xf]
    %v421 = vld [vmem:[%s405 + $0x3c] sm:$0xf]
    %s422 = scalar_lea.vmem %s4, 1
    %v423 = vld [vmem:[%s422] sm:$0x1]
    %v425 = vlaneseq
    %v426 = vshrl.u32 %v425, 7
    %v427 = vsub.s32 0, %v426
    %v428 = vrot.slane %v423, %v427
    %v446 = vunpack.c.l.b16 %v406
    %v447 = vunpack.c.l.b16 %v407
    %v448 = vunpack.c.l.b16 %v408
    %v449 = vunpack.c.l.b16 %v409
    %v450 = vunpack.c.l.b16 %v410
    %v451 = vunpack.c.l.b16 %v411
    %v452 = vunpack.c.l.b16 %v412
    %v453 = vunpack.c.l.b16 %v413
    %v454 = vunpack.c.l.b16 %v414
    %v455 = vunpack.c.l.b16 %v415
    %v456 = vunpack.c.l.b16 %v416
    %v457 = vunpack.c.l.b16 %v417
    %v458 = vunpack.c.l.b16 %v418
    %v459 = vunpack.c.l.b16 %v419
    %v460 = vunpack.c.l.b16 %v420
    %v461 = vunpack.c.l.b16 %v421
    %v462 = vpack.c.b16 %v447, %v446
    %v463 = vpack.c.b16 %v449, %v448
    %v464 = vpack.c.b16 %v451, %v450
    %v465 = vpack.c.b16 %v453, %v452
    %v466 = vpack.c.b16 %v455, %v454
    %v467 = vpack.c.b16 %v457, %v456
    %v468 = vpack.c.b16 %v459, %v458
    %v469 = vpack.c.b16 %v461, %v460
    %478 = vmatprep.subr.bf16.mxu0 0
    %479 = vmatpush1.bf16.msra.mxu0 %v462
    %480 = vmatprep.subr.bf16.mxu0 0
    %481 = vmatpush1.bf16.msra.mxu0 %v463
    %482 = vmatprep.subr.bf16.mxu0 0
    %483 = vmatpush1.bf16.msra.mxu0 %v464
    %484 = vmatprep.subr.bf16.mxu0 0
    %485 = vmatpush1.bf16.msra.mxu0 %v465
    %486 = vmatprep.subr.bf16.mxu0 0
    %487 = vmatpush1.bf16.msra.mxu0 %v466
    %488 = vmatprep.subr.bf16.mxu0 0
    %489 = vmatpush1.bf16.msra.mxu0 %v467
    %490 = vmatprep.subr.bf16.mxu0 0
    %491 = vmatpush1.bf16.msra.mxu0 %v468
    %492 = vmatprep.subr.bf16.mxu0 0
    %493 = vmatpush1.bf16.msra.mxu0 %v469
    %494 = vmatprep.subr.bf16.mxu0 0
    %495 = vmatpush1.bf16.msra.mxu0 0
    %496 = vmatprep.subr.bf16.mxu0 0
    %497 = vmatpush1.bf16.msra.mxu0 0
    %498 = vmatprep.subr.bf16.mxu0 0
    %499 = vmatpush1.bf16.msra.mxu0 0
    %500 = vmatprep.subr.bf16.mxu0 0
    %501 = vmatpush1.bf16.msra.mxu0 0
    %502 = vmatprep.subr.bf16.mxu0 0
    %503 = vmatpush1.bf16.msra.mxu0 0
    %504 = vmatprep.subr.bf16.mxu0 0
    %505 = vmatpush1.bf16.msra.mxu0 0
    %506 = vmatprep.subr.bf16.mxu0 0
    %507 = vmatpush1.bf16.msra.mxu0 0
    %508 = vmatprep.subr.bf16.mxu0 0
    %509 = vmatpush1.bf16.msra.mxu0 0
    %510 = vmatprep.mubr.bf16.mxu0 0
    %511 = vmatmul.mubr.bf16.gmra.mrb[0].mxu0 %v404
    %v512 = vpop.f32.mrb[0].mxu0
    %v513 = vadd.f32 %v428, %v512
    %v514 = vpop.f32.mrb[0].mxu0
    %v515 = vpop.f32.mrb[0].mxu0
    %v516 = vadd.f32 %v428, %v515
    %v517 = vpop.f32.mrb[0].mxu0
    %518 = vdwg.mxu0
    %v519 = vmul.f32 %v513, 0.01
    %v520 = vmul.f32 %v516, 0.01
    %v521 = vmax.f32 %v513, %v519
    %v522 = vmax.f32 %v516, %v520
    %v523 = vpack.c.bf16 %v522, %v521
    %s524 = scalar_lea.vmem [#allocation7], 64
    %v525 = vld [vmem:[%s524] sm:$0xf]
    %v526 = vld [vmem:[%s524 + $0x4] sm:$0xf]
    %v527 = vld [vmem:[%s524 + $0x8] sm:$0xf]
    %v528 = vld [vmem:[%s524 + $0xc] sm:$0xf]
    %v529 = vld [vmem:[%s524 + $0x10] sm:$0xf]
    %v530 = vld [vmem:[%s524 + $0x14] sm:$0xf]
    %v531 = vld [vmem:[%s524 + $0x18] sm:$0xf]
    %v532 = vld [vmem:[%s524 + $0x1c] sm:$0xf]
    %v533 = vld [vmem:[%s524 + $0x20] sm:$0xf]
    %v534 = vld [vmem:[%s524 + $0x24] sm:$0xf]
    %v535 = vld [vmem:[%s524 + $0x28] sm:$0xf]
    %v536 = vld [vmem:[%s524 + $0x2c] sm:$0xf]
    %v537 = vld [vmem:[%s524 + $0x30] sm:$0xf]
    %v538 = vld [vmem:[%s524 + $0x34] sm:$0xf]
    %v539 = vld [vmem:[%s524 + $0x38] sm:$0xf]
    %v540 = vld [vmem:[%s524 + $0x3c] sm:$0xf]
    %s541 = scalar_lea.vmem %s6, 1
    %v542 = vld [vmem:[%s541] sm:$0x1]
    %v544 = vlaneseq
    %v545 = vshrl.u32 %v544, 7
    %v546 = vsub.s32 0, %v545
    %v547 = vrot.slane %v542, %v546
    %v565 = vunpack.c.l.b16 %v525
    %v566 = vunpack.c.l.b16 %v526
    %v567 = vunpack.c.l.b16 %v527
    %v568 = vunpack.c.l.b16 %v528
    %v569 = vunpack.c.l.b16 %v529
    %v570 = vunpack.c.l.b16 %v530
    %v571 = vunpack.c.l.b16 %v531
    %v572 = vunpack.c.l.b16 %v532
    %v573 = vunpack.c.l.b16 %v533
    %v574 = vunpack.c.l.b16 %v534
    %v575 = vunpack.c.l.b16 %v535
    %v576 = vunpack.c.l.b16 %v536
    %v577 = vunpack.c.l.b16 %v537
    %v578 = vunpack.c.l.b16 %v538
    %v579 = vunpack.c.l.b16 %v539
    %v580 = vunpack.c.l.b16 %v540
    %v581 = vpack.c.b16 %v566, %v565
    %v582 = vpack.c.b16 %v568, %v567
    %v583 = vpack.c.b16 %v570, %v569
    %v584 = vpack.c.b16 %v572, %v571
    %v585 = vpack.c.b16 %v574, %v573
    %v586 = vpack.c.b16 %v576, %v575
    %v587 = vpack.c.b16 %v578, %v577
    %v588 = vpack.c.b16 %v580, %v579
    %597 = vmatprep.subr.bf16.mxu0 0
    %598 = vmatpush1.bf16.msra.mxu0 %v581
    %599 = vmatprep.subr.bf16.mxu0 0
    %600 = vmatpush1.bf16.msra.mxu0 %v582
    %601 = vmatprep.subr.bf16.mxu0 0
    %602 = vmatpush1.bf16.msra.mxu0 %v583
    %603 = vmatprep.subr.bf16.mxu0 0
    %604 = vmatpush1.bf16.msra.mxu0 %v584
    %605 = vmatprep.subr.bf16.mxu0 0
    %606 = vmatpush1.bf16.msra.mxu0 %v585
    %607 = vmatprep.subr.bf16.mxu0 0
    %608 = vmatpush1.bf16.msra.mxu0 %v586
    %609 = vmatprep.subr.bf16.mxu0 0
    %610 = vmatpush1.bf16.msra.mxu0 %v587
    %611 = vmatprep.subr.bf16.mxu0 0
    %612 = vmatpush1.bf16.msra.mxu0 %v588
    %613 = vmatprep.subr.bf16.mxu0 0
    %614 = vmatpush1.bf16.msra.mxu0 0
    %615 = vmatprep.subr.bf16.mxu0 0
    %616 = vmatpush1.bf16.msra.mxu0 0
    %617 = vmatprep.subr.bf16.mxu0 0
    %618 = vmatpush1.bf16.msra.mxu0 0
    %619 = vmatprep.subr.bf16.mxu0 0
    %620 = vmatpush1.bf16.msra.mxu0 0
    %621 = vmatprep.subr.bf16.mxu0 0
    %622 = vmatpush1.bf16.msra.mxu0 0
    %623 = vmatprep.subr.bf16.mxu0 0
    %624 = vmatpush1.bf16.msra.mxu0 0
    %625 = vmatprep.subr.bf16.mxu0 0
    %626 = vmatpush1.bf16.msra.mxu0 0
    %627 = vmatprep.subr.bf16.mxu0 0
    %628 = vmatpush1.bf16.msra.mxu0 0
    %629 = vmatprep.mubr.bf16.mxu0 0
    %630 = vmatmul.mubr.bf16.gmra.mrb[0].mxu0 %v523
    %v631 = vpop.f32.mrb[0].mxu0
    %v632 = vadd.f32 %v547, %v631
    %v633 = vpop.f32.mrb[0].mxu0
    %v634 = vpop.f32.mrb[0].mxu0
    %v635 = vadd.f32 %v547, %v634
    %v636 = vpop.f32.mrb[0].mxu0
    %637 = vdwg.mxu0
    %v638 = vadd.f32 %v632, %v402
    %v639 = vadd.f32 %v635, %v403
    %v640 = vmul.f32 %v638, 0.01
    %v641 = vmul.f32 %v639, 0.01
    %v642 = vmax.f32 %v638, %v640
    %v643 = vmax.f32 %v639, %v641
    %v644 = vpack.c.bf16 %v643, %v642
    %s645 = scalar_lea.vmem [#allocation6], 128
    %v646 = vld [vmem:[%s645] sm:$0xf]
    %v647 = vld [vmem:[%s645 + $0x4] sm:$0xf]
    %v648 = vld [vmem:[%s645 + $0x8] sm:$0xf]
    %v649 = vld [vmem:[%s645 + $0xc] sm:$0xf]
    %v650 = vld [vmem:[%s645 + $0x10] sm:$0xf]
    %v651 = vld [vmem:[%s645 + $0x14] sm:$0xf]
    %v652 = vld [vmem:[%s645 + $0x18] sm:$0xf]
    %v653 = vld [vmem:[%s645 + $0x1c] sm:$0xf]
    %v654 = vld [vmem:[%s645 + $0x20] sm:$0xf]
    %v655 = vld [vmem:[%s645 + $0x24] sm:$0xf]
    %v656 = vld [vmem:[%s645 + $0x28] sm:$0xf]
    %v657 = vld [vmem:[%s645 + $0x2c] sm:$0xf]
    %v658 = vld [vmem:[%s645 + $0x30] sm:$0xf]
    %v659 = vld [vmem:[%s645 + $0x34] sm:$0xf]
    %v660 = vld [vmem:[%s645 + $0x38] sm:$0xf]
    %v661 = vld [vmem:[%s645 + $0x3c] sm:$0xf]
    %s662 = scalar_lea.vmem %s4, 2
    %v663 = vld [vmem:[%s662] sm:$0x1]
    %v665 = vlaneseq
    %v666 = vshrl.u32 %v665, 7
    %v667 = vsub.s32 0, %v666
    %v668 = vrot.slane %v663, %v667
    %v686 = vunpack.c.l.b16 %v646
    %v687 = vunpack.c.l.b16 %v647
    %v688 = vunpack.c.l.b16 %v648
    %v689 = vunpack.c.l.b16 %v649
    %v690 = vunpack.c.l.b16 %v650
    %v691 = vunpack.c.l.b16 %v651
    %v692 = vunpack.c.l.b16 %v652
    %v693 = vunpack.c.l.b16 %v653
    %v694 = vunpack.c.l.b16 %v654
    %v695 = vunpack.c.l.b16 %v655
    %v696 = vunpack.c.l.b16 %v656
    %v697 = vunpack.c.l.b16 %v657
    %v698 = vunpack.c.l.b16 %v658
    %v699 = vunpack.c.l.b16 %v659
    %v700 = vunpack.c.l.b16 %v660
    %v701 = vunpack.c.l.b16 %v661
    %v702 = vpack.c.b16 %v687, %v686
    %v703 = vpack.c.b16 %v689, %v688
    %v704 = vpack.c.b16 %v691, %v690
    %v705 = vpack.c.b16 %v693, %v692
    %v706 = vpack.c.b16 %v695, %v694
    %v707 = vpack.c.b16 %v697, %v696
    %v708 = vpack.c.b16 %v699, %v698
    %v709 = vpack.c.b16 %v701, %v700
    %718 = vmatprep.subr.bf16.mxu0 0
    %719 = vmatpush1.bf16.msra.mxu0 %v702
    %720 = vmatprep.subr.bf16.mxu0 0
    %721 = vmatpush1.bf16.msra.mxu0 %v703
    %722 = vmatprep.subr.bf16.mxu0 0
    %723 = vmatpush1.bf16.msra.mxu0 %v704
    %724 = vmatprep.subr.bf16.mxu0 0
    %725 = vmatpush1.bf16.msra.mxu0 %v705
    %726 = vmatprep.subr.bf16.mxu0 0
    %727 = vmatpush1.bf16.msra.mxu0 %v706
    %728 = vmatprep.subr.bf16.mxu0 0
    %729 = vmatpush1.bf16.msra.mxu0 %v707
    %730 = vmatprep.subr.bf16.mxu0 0
    %731 = vmatpush1.bf16.msra.mxu0 %v708
    %732 = vmatprep.subr.bf16.mxu0 0
    %733 = vmatpush1.bf16.msra.mxu0 %v709
    %734 = vmatprep.subr.bf16.mxu0 0
    %735 = vmatpush1.bf16.msra.mxu0 0
    %736 = vmatprep.subr.bf16.mxu0 0
    %737 = vmatpush1.bf16.msra.mxu0 0
    %738 = vmatprep.subr.bf16.mxu0 0
    %739 = vmatpush1.bf16.msra.mxu0 0
    %740 = vmatprep.subr.bf16.mxu0 0
    %741 = vmatpush1.bf16.msra.mxu0 0
    %742 = vmatprep.subr.bf16.mxu0 0
    %743 = vmatpush1.bf16.msra.mxu0 0
    %744 = vmatprep.subr.bf16.mxu0 0
    %745 = vmatpush1.bf16.msra.mxu0 0
    %746 = vmatprep.subr.bf16.mxu0 0
    %747 = vmatpush1.bf16.msra.mxu0 0
    %748 = vmatprep.subr.bf16.mxu0 0
    %749 = vmatpush1.bf16.msra.mxu0 0
    %750 = vmatprep.mubr.bf16.mxu0 0
    %751 = vmatmul.mubr.bf16.gmra.mrb[0].mxu0 %v644
    %v752 = vpop.f32.mrb[0].mxu0
    %v753 = vadd.f32 %v668, %v752
    %v754 = vpop.f32.mrb[0].mxu0
    %v755 = vpop.f32.mrb[0].mxu0
    %v756 = vadd.f32 %v668, %v755
    %v757 = vpop.f32.mrb[0].mxu0
    %758 = vdwg.mxu0
    %v759 = vmul.f32 %v753, 0.01
    %v760 = vmul.f32 %v756, 0.01
    %v761 = vmax.f32 %v753, %v759
    %v762 = vmax.f32 %v756, %v760
    %v763 = vpack.c.bf16 %v762, %v761
    %s764 = scalar_lea.vmem [#allocation7], 128
    %v765 = vld [vmem:[%s764] sm:$0xf]
    %v766 = vld [vmem:[%s764 + $0x4] sm:$0xf]
    %v767 = vld [vmem:[%s764 + $0x8] sm:$0xf]
    %v768 = vld [vmem:[%s764 + $0xc] sm:$0xf]
    %v769 = vld [vmem:[%s764 + $0x10] sm:$0xf]
    %v770 = vld [vmem:[%s764 + $0x14] sm:$0xf]
    %v771 = vld [vmem:[%s764 + $0x18] sm:$0xf]
    %v772 = vld [vmem:[%s764 + $0x1c] sm:$0xf]
    %v773 = vld [vmem:[%s764 + $0x20] sm:$0xf]
    %v774 = vld [vmem:[%s764 + $0x24] sm:$0xf]
    %v775 = vld [vmem:[%s764 + $0x28] sm:$0xf]
    %v776 = vld [vmem:[%s764 + $0x2c] sm:$0xf]
    %v777 = vld [vmem:[%s764 + $0x30] sm:$0xf]
    %v778 = vld [vmem:[%s764 + $0x34] sm:$0xf]
    %v779 = vld [vmem:[%s764 + $0x38] sm:$0xf]
    %v780 = vld [vmem:[%s764 + $0x3c] sm:$0xf]
    %s781 = scalar_lea.vmem %s6, 2
    %v782 = vld [vmem:[%s781] sm:$0x1]
    %v784 = vlaneseq
    %v785 = vshrl.u32 %v784, 7
    %v786 = vsub.s32 0, %v785
    %v787 = vrot.slane %v782, %v786
    %v805 = vunpack.c.l.b16 %v765
    %v806 = vunpack.c.l.b16 %v766
    %v807 = vunpack.c.l.b16 %v767
    %v808 = vunpack.c.l.b16 %v768
    %v809 = vunpack.c.l.b16 %v769
    %v810 = vunpack.c.l.b16 %v770
    %v811 = vunpack.c.l.b16 %v771
    %v812 = vunpack.c.l.b16 %v772
    %v813 = vunpack.c.l.b16 %v773
    %v814 = vunpack.c.l.b16 %v774
    %v815 = vunpack.c.l.b16 %v775
    %v816 = vunpack.c.l.b16 %v776
    %v817 = vunpack.c.l.b16 %v777
    %v818 = vunpack.c.l.b16 %v778
    %v819 = vunpack.c.l.b16 %v779
    %v820 = vunpack.c.l.b16 %v780
    %v821 = vpack.c.b16 %v806, %v805
    %v822 = vpack.c.b16 %v808, %v807
    %v823 = vpack.c.b16 %v810, %v809
    %v824 = vpack.c.b16 %v812, %v811
    %v825 = vpack.c.b16 %v814, %v813
    %v826 = vpack.c.b16 %v816, %v815
    %v827 = vpack.c.b16 %v818, %v817
    %v828 = vpack.c.b16 %v820, %v819
    %837 = vmatprep.subr.bf16.mxu0 0
    %838 = vmatpush1.bf16.msra.mxu0 %v821
    %839 = vmatprep.subr.bf16.mxu0 0
    %840 = vmatpush1.bf16.msra.mxu0 %v822
    %841 = vmatprep.subr.bf16.mxu0 0
    %842 = vmatpush1.bf16.msra.mxu0 %v823
    %843 = vmatprep.subr.bf16.mxu0 0
    %844 = vmatpush1.bf16.msra.mxu0 %v824
    %845 = vmatprep.subr.bf16.mxu0 0
    %846 = vmatpush1.bf16.msra.mxu0 %v825
    %847 = vmatprep.subr.bf16.mxu0 0
    %848 = vmatpush1.bf16.msra.mxu0 %v826
    %849 = vmatprep.subr.bf16.mxu0 0
    %850 = vmatpush1.bf16.msra.mxu0 %v827
    %851 = vmatprep.subr.bf16.mxu0 0
    %852 = vmatpush1.bf16.msra.mxu0 %v828
    %853 = vmatprep.subr.bf16.mxu0 0
    %854 = vmatpush1.bf16.msra.mxu0 0
    %855 = vmatprep.subr.bf16.mxu0 0
    %856 = vmatpush1.bf16.msra.mxu0 0
    %857 = vmatprep.subr.bf16.mxu0 0
    %858 = vmatpush1.bf16.msra.mxu0 0
    %859 = vmatprep.subr.bf16.mxu0 0
    %860 = vmatpush1.bf16.msra.mxu0 0
    %861 = vmatprep.subr.bf16.mxu0 0
    %862 = vmatpush1.bf16.msra.mxu0 0
    %863 = vmatprep.subr.bf16.mxu0 0
    %864 = vmatpush1.bf16.msra.mxu0 0
    %865 = vmatprep.subr.bf16.mxu0 0
    %866 = vmatpush1.bf16.msra.mxu0 0
    %867 = vmatprep.subr.bf16.mxu0 0
    %868 = vmatpush1.bf16.msra.mxu0 0
    %869 = vmatprep.mubr.bf16.mxu0 0
    %870 = vmatmul.mubr.bf16.gmra.mrb[0].mxu0 %v763
    %v871 = vpop.f32.mrb[0].mxu0
    %v872 = vadd.f32 %v787, %v871
    %v873 = vpop.f32.mrb[0].mxu0
    %v874 = vpop.f32.mrb[0].mxu0
    %v875 = vadd.f32 %v787, %v874
    %v876 = vpop.f32.mrb[0].mxu0
    %877 = vdwg.mxu0
    %v878 = vadd.f32 %v872, %v642
    %v879 = vadd.f32 %v875, %v643
    %v880 = vmul.f32 %v878, 0.01
    %v881 = vmul.f32 %v879, 0.01
    %v882 = vmax.f32 %v878, %v880
    %v883 = vmax.f32 %v879, %v881
    %v884 = vpack.c.bf16 %v883, %v882
    %s885 = scalar_lea.vmem [#allocation6], 192
    %v886 = vld [vmem:[%s885] sm:$0xf]
    %v887 = vld [vmem:[%s885 + $0x4] sm:$0xf]
    %v888 = vld [vmem:[%s885 + $0x8] sm:$0xf]
    %v889 = vld [vmem:[%s885 + $0xc] sm:$0xf]
    %v890 = vld [vmem:[%s885 + $0x10] sm:$0xf]
    %v891 = vld [vmem:[%s885 + $0x14] sm:$0xf]
    %v892 = vld [vmem:[%s885 + $0x18] sm:$0xf]
    %v893 = vld [vmem:[%s885 + $0x1c] sm:$0xf]
    %v894 = vld [vmem:[%s885 + $0x20] sm:$0xf]
    %v895 = vld [vmem:[%s885 + $0x24] sm:$0xf]
    %v896 = vld [vmem:[%s885 + $0x28] sm:$0xf]
    %v897 = vld [vmem:[%s885 + $0x2c] sm:$0xf]
    %v898 = vld [vmem:[%s885 + $0x30] sm:$0xf]
    %v899 = vld [vmem:[%s885 + $0x34] sm:$0xf]
    %v900 = vld [vmem:[%s885 + $0x38] sm:$0xf]
    %v901 = vld [vmem:[%s885 + $0x3c] sm:$0xf]
    %s902 = scalar_lea.vmem %s4, 3
    %v903 = vld [vmem:[%s902] sm:$0x1]
    %v905 = vlaneseq
    %v906 = vshrl.u32 %v905, 7
    %v907 = vsub.s32 0, %v906
    %v908 = vrot.slane %v903, %v907
    %v926 = vunpack.c.l.b16 %v886
    %v927 = vunpack.c.l.b16 %v887
    %v928 = vunpack.c.l.b16 %v888
    %v929 = vunpack.c.l.b16 %v889
    %v930 = vunpack.c.l.b16 %v890
    %v931 = vunpack.c.l.b16 %v891
    %v932 = vunpack.c.l.b16 %v892
    %v933 = vunpack.c.l.b16 %v893
    %v934 = vunpack.c.l.b16 %v894
    %v935 = vunpack.c.l.b16 %v895
    %v936 = vunpack.c.l.b16 %v896
    %v937 = vunpack.c.l.b16 %v897
    %v938 = vunpack.c.l.b16 %v898
    %v939 = vunpack.c.l.b16 %v899
    %v940 = vunpack.c.l.b16 %v900
    %v941 = vunpack.c.l.b16 %v901
    %v942 = vpack.c.b16 %v927, %v926
    %v943 = vpack.c.b16 %v929, %v928
    %v944 = vpack.c.b16 %v931, %v930
    %v945 = vpack.c.b16 %v933, %v932
    %v946 = vpack.c.b16 %v935, %v934
    %v947 = vpack.c.b16 %v937, %v936
    %v948 = vpack.c.b16 %v939, %v938
    %v949 = vpack.c.b16 %v941, %v940
    %958 = vmatprep.subr.bf16.mxu0 0
    %959 = vmatpush1.bf16.msra.mxu0 %v942
    %960 = vmatprep.subr.bf16.mxu0 0
    %961 = vmatpush1.bf16.msra.mxu0 %v943
    %962 = vmatprep.subr.bf16.mxu0 0
    %963 = vmatpush1.bf16.msra.mxu0 %v944
    %964 = vmatprep.subr.bf16.mxu0 0
    %965 = vmatpush1.bf16.msra.mxu0 %v945
    %966 = vmatprep.subr.bf16.mxu0 0
    %967 = vmatpush1.bf16.msra.mxu0 %v946
    %968 = vmatprep.subr.bf16.mxu0 0
    %969 = vmatpush1.bf16.msra.mxu0 %v947
    %970 = vmatprep.subr.bf16.mxu0 0
    %971 = vmatpush1.bf16.msra.mxu0 %v948
    %972 = vmatprep.subr.bf16.mxu0 0
    %973 = vmatpush1.bf16.msra.mxu0 %v949
    %974 = vmatprep.subr.bf16.mxu0 0
    %975 = vmatpush1.bf16.msra.mxu0 0
    %976 = vmatprep.subr.bf16.mxu0 0
    %977 = vmatpush1.bf16.msra.mxu0 0
    %978 = vmatprep.subr.bf16.mxu0 0
    %979 = vmatpush1.bf16.msra.mxu0 0
    %980 = vmatprep.subr.bf16.mxu0 0
    %981 = vmatpush1.bf16.msra.mxu0 0
    %982 = vmatprep.subr.bf16.mxu0 0
    %983 = vmatpush1.bf16.msra.mxu0 0
    %984 = vmatprep.subr.bf16.mxu0 0
    %985 = vmatpush1.bf16.msra.mxu0 0
    %986 = vmatprep.subr.bf16.mxu0 0
    %987 = vmatpush1.bf16.msra.mxu0 0
    %988 = vmatprep.subr.bf16.mxu0 0
    %989 = vmatpush1.bf16.msra.mxu0 0
    %990 = vmatprep.mubr.bf16.mxu0 0
    %991 = vmatmul.mubr.bf16.gmra.mrb[0].mxu0 %v884
    %v992 = vpop.f32.mrb[0].mxu0
    %v993 = vadd.f32 %v908, %v992
    %v994 = vpop.f32.mrb[0].mxu0
    %v995 = vpop.f32.mrb[0].mxu0
    %v996 = vadd.f32 %v908, %v995
    %v997 = vpop.f32.mrb[0].mxu0
    %998 = vdwg.mxu0
    %v999 = vmul.f32 %v993, 0.01
    %v1000 = vmul.f32 %v996, 0.01
    %v1001 = vmax.f32 %v993, %v999
    %v1002 = vmax.f32 %v996, %v1000
    %v1003 = vpack.c.bf16 %v1002, %v1001
    %s1004 = scalar_lea.vmem [#allocation7], 192
    %v1005 = vld [vmem:[%s1004] sm:$0xf]
    %v1006 = vld [vmem:[%s1004 + $0x4] sm:$0xf]
    %v1007 = vld [vmem:[%s1004 + $0x8] sm:$0xf]
    %v1008 = vld [vmem:[%s1004 + $0xc] sm:$0xf]
    %v1009 = vld [vmem:[%s1004 + $0x10] sm:$0xf]
    %v1010 = vld [vmem:[%s1004 + $0x14] sm:$0xf]
    %v1011 = vld [vmem:[%s1004 + $0x18] sm:$0xf]
    %v1012 = vld [vmem:[%s1004 + $0x1c] sm:$0xf]
    %v1013 = vld [vmem:[%s1004 + $0x20] sm:$0xf]
    %v1014 = vld [vmem:[%s1004 + $0x24] sm:$0xf]
    %v1015 = vld [vmem:[%s1004 + $0x28] sm:$0xf]
    %v1016 = vld [vmem:[%s1004 + $0x2c] sm:$0xf]
    %v1017 = vld [vmem:[%s1004 + $0x30] sm:$0xf]
    %v1018 = vld [vmem:[%s1004 + $0x34] sm:$0xf]
    %v1019 = vld [vmem:[%s1004 + $0x38] sm:$0xf]
    %v1020 = vld [vmem:[%s1004 + $0x3c] sm:$0xf]
    %s1021 = scalar_lea.vmem %s6, 3
    %v1022 = vld [vmem:[%s1021] sm:$0x1]
    %v1024 = vlaneseq
    %v1025 = vshrl.u32 %v1024, 7
    %v1026 = vsub.s32 0, %v1025
    %v1027 = vrot.slane %v1022, %v1026
    %v1045 = vunpack.c.l.b16 %v1005
    %v1046 = vunpack.c.l.b16 %v1006
    %v1047 = vunpack.c.l.b16 %v1007
    %v1048 = vunpack.c.l.b16 %v1008
    %v1049 = vunpack.c.l.b16 %v1009
    %v1050 = vunpack.c.l.b16 %v1010
    %v1051 = vunpack.c.l.b16 %v1011
    %v1052 = vunpack.c.l.b16 %v1012
    %v1053 = vunpack.c.l.b16 %v1013
    %v1054 = vunpack.c.l.b16 %v1014
    %v1055 = vunpack.c.l.b16 %v1015
    %v1056 = vunpack.c.l.b16 %v1016
    %v1057 = vunpack.c.l.b16 %v1017
    %v1058 = vunpack.c.l.b16 %v1018
    %v1059 = vunpack.c.l.b16 %v1019
    %v1060 = vunpack.c.l.b16 %v1020
    %v1061 = vpack.c.b16 %v1046, %v1045
    %v1062 = vpack.c.b16 %v1048, %v1047
    %v1063 = vpack.c.b16 %v1050, %v1049
    %v1064 = vpack.c.b16 %v1052, %v1051
    %v1065 = vpack.c.b16 %v1054, %v1053
    %v1066 = vpack.c.b16 %v1056, %v1055
    %v1067 = vpack.c.b16 %v1058, %v1057
    %v1068 = vpack.c.b16 %v1060, %v1059
    %1077 = vmatprep.subr.bf16.mxu0 0
    %1078 = vmatpush1.bf16.msra.mxu0 %v1061
    %1079 = vmatprep.subr.bf16.mxu0 0
    %1080 = vmatpush1.bf16.msra.mxu0 %v1062
    %1081 = vmatprep.subr.bf16.mxu0 0
    %1082 = vmatpush1.bf16.msra.mxu0 %v1063
    %1083 = vmatprep.subr.bf16.mxu0 0
    %1084 = vmatpush1.bf16.msra.mxu0 %v1064
    %1085 = vmatprep.subr.bf16.mxu0 0
    %1086 = vmatpush1.bf16.msra.mxu0 %v1065
    %1087 = vmatprep.subr.bf16.mxu0 0
    %1088 = vmatpush1.bf16.msra.mxu0 %v1066
    %1089 = vmatprep.subr.bf16.mxu0 0
    %1090 = vmatpush1.bf16.msra.mxu0 %v1067
    %1091 = vmatprep.subr.bf16.mxu0 0
    %1092 = vmatpush1.bf16.msra.mxu0 %v1068
    %1093 = vmatprep.subr.bf16.mxu0 0
    %1094 = vmatpush1.bf16.msra.mxu0 0
    %1095 = vmatprep.subr.bf16.mxu0 0
    %1096 = vmatpush1.bf16.msra.mxu0 0
    %1097 = vmatprep.subr.bf16.mxu0 0
    %1098 = vmatpush1.bf16.msra.mxu0 0
    %1099 = vmatprep.subr.bf16.mxu0 0
    %1100 = vmatpush1.bf16.msra.mxu0 0
    %1101 = vmatprep.subr.bf16.mxu0 0
    %1102 = vmatpush1.bf16.msra.mxu0 0
    %1103 = vmatprep.subr.bf16.mxu0 0
    %1104 = vmatpush1.bf16.msra.mxu0 0
    %1105 = vmatprep.subr.bf16.mxu0 0
    %1106 = vmatpush1.bf16.msra.mxu0 0
    %1107 = vmatprep.subr.bf16.mxu0 0
    %1108 = vmatpush1.bf16.msra.mxu0 0
    %1109 = vmatprep.mubr.bf16.mxu0 0
    %1110 = vmatmul.mubr.bf16.gmra.mrb[0].mxu0 %v1003
    %v1111 = vpop.f32.mrb[0].mxu0
    %v1112 = vadd.f32 %v1027, %v1111
    %v1113 = vpop.f32.mrb[0].mxu0
    %v1114 = vpop.f32.mrb[0].mxu0
    %v1115 = vadd.f32 %v1027, %v1114
    %v1116 = vpop.f32.mrb[0].mxu0
    %1117 = vdwg.mxu0
    %v1118 = vadd.f32 %v1112, %v882
    %v1119 = vadd.f32 %v1115, %v883
    %v1120 = vmul.f32 %v1118, 0.01
    %v1121 = vmul.f32 %v1119, 0.01
    %v1122 = vmax.f32 %v1118, %v1120
    %v1123 = vmax.f32 %v1119, %v1121
    %v1124 = vpack.c.bf16 %v1123, %v1122
    %s1125 = scalar_lea.vmem [#allocation6], 256
    %v1126 = vld [vmem:[%s1125] sm:$0xf]
    %v1127 = vld [vmem:[%s1125 + $0x4] sm:$0xf]
    %v1128 = vld [vmem:[%s1125 + $0x8] sm:$0xf]
    %v1129 = vld [vmem:[%s1125 + $0xc] sm:$0xf]
    %v1130 = vld [vmem:[%s1125 + $0x10] sm:$0xf]
    %v1131 = vld [vmem:[%s1125 + $0x14] sm:$0xf]
    %v1132 = vld [vmem:[%s1125 + $0x18] sm:$0xf]
    %v1133 = vld [vmem:[%s1125 + $0x1c] sm:$0xf]
    %v1134 = vld [vmem:[%s1125 + $0x20] sm:$0xf]
    %v1135 = vld [vmem:[%s1125 + $0x24] sm:$0xf]
    %v1136 = vld [vmem:[%s1125 + $0x28] sm:$0xf]
    %v1137 = vld [vmem:[%s1125 + $0x2c] sm:$0xf]
    %v1138 = vld [vmem:[%s1125 + $0x30] sm:$0xf]
    %v1139 = vld [vmem:[%s1125 + $0x34] sm:$0xf]
    %v1140 = vld [vmem:[%s1125 + $0x38] sm:$0xf]
    %v1141 = vld [vmem:[%s1125 + $0x3c] sm:$0xf]
    %s1142 = scalar_lea.vmem %s4, 4
    %v1143 = vld [vmem:[%s1142] sm:$0x1]
    %v1145 = vlaneseq
    %v1146 = vshrl.u32 %v1145, 7
    %v1147 = vsub.s32 0, %v1146
    %v1148 = vrot.slane %v1143, %v1147
    %v1166 = vunpack.c.l.b16 %v1126
    %v1167 = vunpack.c.l.b16 %v1127
    %v1168 = vunpack.c.l.b16 %v1128
    %v1169 = vunpack.c.l.b16 %v1129
    %v1170 = vunpack.c.l.b16 %v1130
    %v1171 = vunpack.c.l.b16 %v1131
    %v1172 = vunpack.c.l.b16 %v1132
    %v1173 = vunpack.c.l.b16 %v1133
    %v1174 = vunpack.c.l.b16 %v1134
    %v1175 = vunpack.c.l.b16 %v1135
    %v1176 = vunpack.c.l.b16 %v1136
    %v1177 = vunpack.c.l.b16 %v1137
    %v1178 = vunpack.c.l.b16 %v1138
    %v1179 = vunpack.c.l.b16 %v1139
    %v1180 = vunpack.c.l.b16 %v1140
    %v1181 = vunpack.c.l.b16 %v1141
    %v1182 = vpack.c.b16 %v1167, %v1166
    %v1183 = vpack.c.b16 %v1169, %v1168
    %v1184 = vpack.c.b16 %v1171, %v1170
    %v1185 = vpack.c.b16 %v1173, %v1172
    %v1186 = vpack.c.b16 %v1175, %v1174
    %v1187 = vpack.c.b16 %v1177, %v1176
    %v1188 = vpack.c.b16 %v1179, %v1178
    %v1189 = vpack.c.b16 %v1181, %v1180
    %1198 = vmatprep.subr.bf16.mxu0 0
    %1199 = vmatpush1.bf16.msra.mxu0 %v1182
    %1200 = vmatprep.subr.bf16.mxu0 0
    %1201 = vmatpush1.bf16.msra.mxu0 %v1183
    %1202 = vmatprep.subr.bf16.mxu0 0
    %1203 = vmatpush1.bf16.msra.mxu0 %v1184
    %1204 = vmatprep.subr.bf16.mxu0 0
    %1205 = vmatpush1.bf16.msra.mxu0 %v1185
    %1206 = vmatprep.subr.bf16.mxu0 0
    %1207 = vmatpush1.bf16.msra.mxu0 %v1186
    %1208 = vmatprep.subr.bf16.mxu0 0
    %1209 = vmatpush1.bf16.msra.mxu0 %v1187
    %1210 = vmatprep.subr.bf16.mxu0 0
    %1211 = vmatpush1.bf16.msra.mxu0 %v1188
    %1212 = vmatprep.subr.bf16.mxu0 0
    %1213 = vmatpush1.bf16.msra.mxu0 %v1189
    %1214 = vmatprep.subr.bf16.mxu0 0
    %1215 = vmatpush1.bf16.msra.mxu0 0
    %1216 = vmatprep.subr.bf16.mxu0 0
    %1217 = vmatpush1.bf16.msra.mxu0 0
    %1218 = vmatprep.subr.bf16.mxu0 0
    %1219 = vmatpush1.bf16.msra.mxu0 0
    %1220 = vmatprep.subr.bf16.mxu0 0
    %1221 = vmatpush1.bf16.msra.mxu0 0
    %1222 = vmatprep.subr.bf16.mxu0 0
    %1223 = vmatpush1.bf16.msra.mxu0 0
    %1224 = vmatprep.subr.bf16.mxu0 0
    %1225 = vmatpush1.bf16.msra.mxu0 0
    %1226 = vmatprep.subr.bf16.mxu0 0
    %1227 = vmatpush1.bf16.msra.mxu0 0
    %1228 = vmatprep.subr.bf16.mxu0 0
    %1229 = vmatpush1.bf16.msra.mxu0 0
    %1230 = vmatprep.mubr.bf16.mxu0 0
    %1231 = vmatmul.mubr.bf16.gmra.mrb[0].mxu0 %v1124
    %v1232 = vpop.f32.mrb[0].mxu0
    %v1233 = vadd.f32 %v1148, %v1232
    %v1234 = vpop.f32.mrb[0].mxu0
    %v1235 = vpop.f32.mrb[0].mxu0
    %v1236 = vadd.f32 %v1148, %v1235
    %v1237 = vpop.f32.mrb[0].mxu0
    %1238 = vdwg.mxu0
    %v1239 = vmul.f32 %v1233, 0.01
    %v1240 = vmul.f32 %v1236, 0.01
    %v1241 = vmax.f32 %v1233, %v1239
    %v1242 = vmax.f32 %v1236, %v1240
    %v1243 = vpack.c.bf16 %v1242, %v1241
    %s1244 = scalar_lea.vmem [#allocation7], 256
    %v1245 = vld [vmem:[%s1244] sm:$0xf]
    %v1246 = vld [vmem:[%s1244 + $0x4] sm:$0xf]
    %v1247 = vld [vmem:[%s1244 + $0x8] sm:$0xf]
    %v1248 = vld [vmem:[%s1244 + $0xc] sm:$0xf]
    %v1249 = vld [vmem:[%s1244 + $0x10] sm:$0xf]
    %v1250 = vld [vmem:[%s1244 + $0x14] sm:$0xf]
    %v1251 = vld [vmem:[%s1244 + $0x18] sm:$0xf]
    %v1252 = vld [vmem:[%s1244 + $0x1c] sm:$0xf]
    %v1253 = vld [vmem:[%s1244 + $0x20] sm:$0xf]
    %v1254 = vld [vmem:[%s1244 + $0x24] sm:$0xf]
    %v1255 = vld [vmem:[%s1244 + $0x28] sm:$0xf]
    %v1256 = vld [vmem:[%s1244 + $0x2c] sm:$0xf]
    %v1257 = vld [vmem:[%s1244 + $0x30] sm:$0xf]
    %v1258 = vld [vmem:[%s1244 + $0x34] sm:$0xf]
    %v1259 = vld [vmem:[%s1244 + $0x38] sm:$0xf]
    %v1260 = vld [vmem:[%s1244 + $0x3c] sm:$0xf]
    %s1261 = scalar_lea.vmem %s6, 4
    %v1262 = vld [vmem:[%s1261] sm:$0x1]
    %v1264 = vlaneseq
    %v1265 = vshrl.u32 %v1264, 7
    %v1266 = vsub.s32 0, %v1265
    %v1267 = vrot.slane %v1262, %v1266
    %v1285 = vunpack.c.l.b16 %v1245
    %v1286 = vunpack.c.l.b16 %v1246
    %v1287 = vunpack.c.l.b16 %v1247
    %v1288 = vunpack.c.l.b16 %v1248
    %v1289 = vunpack.c.l.b16 %v1249
    %v1290 = vunpack.c.l.b16 %v1250
    %v1291 = vunpack.c.l.b16 %v1251
    %v1292 = vunpack.c.l.b16 %v1252
    %v1293 = vunpack.c.l.b16 %v1253
    %v1294 = vunpack.c.l.b16 %v1254
    %v1295 = vunpack.c.l.b16 %v1255
    %v1296 = vunpack.c.l.b16 %v1256
    %v1297 = vunpack.c.l.b16 %v1257
    %v1298 = vunpack.c.l.b16 %v1258
    %v1299 = vunpack.c.l.b16 %v1259
    %v1300 = vunpack.c.l.b16 %v1260
    %v1301 = vpack.c.b16 %v1286, %v1285
    %v1302 = vpack.c.b16 %v1288, %v1287
    %v1303 = vpack.c.b16 %v1290, %v1289
    %v1304 = vpack.c.b16 %v1292, %v1291
    %v1305 = vpack.c.b16 %v1294, %v1293
    %v1306 = vpack.c.b16 %v1296, %v1295
    %v1307 = vpack.c.b16 %v1298, %v1297
    %v1308 = vpack.c.b16 %v1300, %v1299
    %1317 = vmatprep.subr.bf16.mxu0 0
    %1318 = vmatpush1.bf16.msra.mxu0 %v1301
    %1319 = vmatprep.subr.bf16.mxu0 0
    %1320 = vmatpush1.bf16.msra.mxu0 %v1302
    %1321 = vmatprep.subr.bf16.mxu0 0
    %1322 = vmatpush1.bf16.msra.mxu0 %v1303
    %1323 = vmatprep.subr.bf16.mxu0 0
    %1324 = vmatpush1.bf16.msra.mxu0 %v1304
    %1325 = vmatprep.subr.bf16.mxu0 0
    %1326 = vmatpush1.bf16.msra.mxu0 %v1305
    %1327 = vmatprep.subr.bf16.mxu0 0
    %1328 = vmatpush1.bf16.msra.mxu0 %v1306
    %1329 = vmatprep.subr.bf16.mxu0 0
    %1330 = vmatpush1.bf16.msra.mxu0 %v1307
    %1331 = vmatprep.subr.bf16.mxu0 0
    %1332 = vmatpush1.bf16.msra.mxu0 %v1308
    %1333 = vmatprep.subr.bf16.mxu0 0
    %1334 = vmatpush1.bf16.msra.mxu0 0
    %1335 = vmatprep.subr.bf16.mxu0 0
    %1336 = vmatpush1.bf16.msra.mxu0 0
    %1337 = vmatprep.subr.bf16.mxu0 0
    %1338 = vmatpush1.bf16.msra.mxu0 0
    %1339 = vmatprep.subr.bf16.mxu0 0
    %1340 = vmatpush1.bf16.msra.mxu0 0
    %1341 = vmatprep.subr.bf16.mxu0 0
    %1342 = vmatpush1.bf16.msra.mxu0 0
    %1343 = vmatprep.subr.bf16.mxu0 0
    %1344 = vmatpush1.bf16.msra.mxu0 0
    %1345 = vmatprep.subr.bf16.mxu0 0
    %1346 = vmatpush1.bf16.msra.mxu0 0
    %1347 = vmatprep.subr.bf16.mxu0 0
    %1348 = vmatpush1.bf16.msra.mxu0 0
    %1349 = vmatprep.mubr.bf16.mxu0 0
    %1350 = vmatmul.mubr.bf16.gmra.mrb[0].mxu0 %v1243
    %v1351 = vpop.f32.mrb[0].mxu0
    %v1352 = vadd.f32 %v1267, %v1351
    %v1353 = vpop.f32.mrb[0].mxu0
    %v1354 = vpop.f32.mrb[0].mxu0
    %v1355 = vadd.f32 %v1267, %v1354
    %v1356 = vpop.f32.mrb[0].mxu0
    %1357 = vdwg.mxu0
    %v1358 = vadd.f32 %v1352, %v1122
    %v1359 = vadd.f32 %v1355, %v1123
    %v1360 = vmul.f32 %v1358, 0.01
    %v1361 = vmul.f32 %v1359, 0.01
    %v1362 = vmax.f32 %v1358, %v1360
    %v1363 = vmax.f32 %v1359, %v1361
    %v1364 = vpack.c.bf16 %v1363, %v1362
    %v1365 = vld [vmem:[#allocation9] sm:$0xf]
    %v1366 = vld [vmem:[#allocation9 + $0x4] sm:$0xf]
    %v1367 = vld [vmem:[#allocation9 + $0x8] sm:$0xf]
    %v1368 = vld [vmem:[#allocation9 + $0xc] sm:$0xf]
    %v1369 = vld [vmem:[#allocation9 + $0x10] sm:$0xf]
    %v1370 = vld [vmem:[#allocation9 + $0x14] sm:$0xf]
    %v1371 = vld [vmem:[#allocation9 + $0x18] sm:$0xf]
    %v1372 = vld [vmem:[#allocation9 + $0x1c] sm:$0xf]
    %v1373 = vld [vmem:[#allocation9 + $0x20] sm:$0xf]
    %v1374 = vld [vmem:[#allocation9 + $0x24] sm:$0xf]
    %v1375 = vld [vmem:[#allocation9 + $0x28] sm:$0xf]
    %v1376 = vld [vmem:[#allocation9 + $0x2c] sm:$0xf]
    %v1377 = vld [vmem:[#allocation9 + $0x30] sm:$0xf]
    %v1378 = vld [vmem:[#allocation9 + $0x34] sm:$0xf]
    %v1379 = vld [vmem:[#allocation9 + $0x38] sm:$0xf]
    %v1380 = vld [vmem:[#allocation9 + $0x3c] sm:$0xf]
    %v1381 = vld [vmem:[%s8] sm:$0x1]
    %v1383 = vlaneseq
    %v1384 = vshrl.u32 %v1383, 7
    %v1385 = vsub.s32 0, %v1384
    %v1386 = vrot.slane %v1381, %v1385
    %v1404 = vunpack.c.l.b16 %v1365
    %v1405 = vunpack.c.l.b16 %v1366
    %v1406 = vunpack.c.l.b16 %v1367
    %v1407 = vunpack.c.l.b16 %v1368
    %v1408 = vunpack.c.l.b16 %v1369
    %v1409 = vunpack.c.l.b16 %v1370
    %v1410 = vunpack.c.l.b16 %v1371
    %v1411 = vunpack.c.l.b16 %v1372
    %v1412 = vunpack.c.l.b16 %v1373
    %v1413 = vunpack.c.l.b16 %v1374
    %v1414 = vunpack.c.l.b16 %v1375
    %v1415 = vunpack.c.l.b16 %v1376
    %v1416 = vunpack.c.l.b16 %v1377
    %v1417 = vunpack.c.l.b16 %v1378
    %v1418 = vunpack.c.l.b16 %v1379
    %v1419 = vunpack.c.l.b16 %v1380
    %v1420 = vpack.c.b16 %v1405, %v1404
    %v1421 = vpack.c.b16 %v1407, %v1406
    %v1422 = vpack.c.b16 %v1409, %v1408
    %v1423 = vpack.c.b16 %v1411, %v1410
    %v1424 = vpack.c.b16 %v1413, %v1412
    %v1425 = vpack.c.b16 %v1415, %v1414
    %v1426 = vpack.c.b16 %v1417, %v1416
    %v1427 = vpack.c.b16 %v1419, %v1418
    %1436 = vmatprep.subr.bf16.mxu0 0
    %1437 = vmatpush1.bf16.msra.mxu0 %v1420
    %1438 = vmatprep.subr.bf16.mxu0 0
    %1439 = vmatpush1.bf16.msra.mxu0 %v1421
    %1440 = vmatprep.subr.bf16.mxu0 0
    %1441 = vmatpush1.bf16.msra.mxu0 %v1422
    %1442 = vmatprep.subr.bf16.mxu0 0
    %1443 = vmatpush1.bf16.msra.mxu0 %v1423
    %1444 = vmatprep.subr.bf16.mxu0 0
    %1445 = vmatpush1.bf16.msra.mxu0 %v1424
    %1446 = vmatprep.subr.bf16.mxu0 0
    %1447 = vmatpush1.bf16.msra.mxu0 %v1425
    %1448 = vmatprep.subr.bf16.mxu0 0
    %1449 = vmatpush1.bf16.msra.mxu0 %v1426
    %1450 = vmatprep.subr.bf16.mxu0 0
    %1451 = vmatpush1.bf16.msra.mxu0 %v1427
    %1452 = vmatprep.subr.bf16.mxu0 0
    %1453 = vmatpush1.bf16.msra.mxu0 0
    %1454 = vmatprep.subr.bf16.mxu0 0
    %1455 = vmatpush1.bf16.msra.mxu0 0
    %1456 = vmatprep.subr.bf16.mxu0 0
    %1457 = vmatpush1.bf16.msra.mxu0 0
    %1458 = vmatprep.subr.bf16.mxu0 0
    %1459 = vmatpush1.bf16.msra.mxu0 0
    %1460 = vmatprep.subr.bf16.mxu0 0
    %1461 = vmatpush1.bf16.msra.mxu0 0
    %1462 = vmatprep.subr.bf16.mxu0 0
    %1463 = vmatpush1.bf16.msra.mxu0 0
    %1464 = vmatprep.subr.bf16.mxu0 0
    %1465 = vmatpush1.bf16.msra.mxu0 0
    %1466 = vmatprep.subr.bf16.mxu0 0
    %1467 = vmatpush1.bf16.msra.mxu0 0
    %1468 = vmatprep.mubr.bf16.mxu0 0
    %1469 = vmatmul.mubr.bf16.gmra.mrb[0].mxu0 %v1364
    %v1470 = vpop.f32.mrb[0].mxu0
    %v1471 = vadd.f32 %v1386, %v1470
    %v1472 = vpop.f32.mrb[0].mxu0
    %v1473 = vpop.f32.mrb[0].mxu0
    %v1474 = vadd.f32 %v1386, %v1473
    %v1475 = vpop.f32.mrb[0].mxu0
    %1476 = vdwg.mxu0
    %vm1477 = vcmask 64512
    %1478 = vst.msk [vmem:[%s9] sm:$0xff] %vm1477, %v1471
    %1479 = vst.msk [vmem:[%s9 + $0x8] sm:$0xff] %vm1477, %v1474
    // Predicated region
    $region58: #{tpu_custom_call.1} parent=1 // pred_check
      _
    $region59: #{tpu_custom_call.1} parent=1 // pred_check_branch
      %1481 = sbr.rel (0) target = $region61
    $region60: #{tpu_custom_call.1} parent=1 // pred_region
      _
    $region61: #{tpu_custom_call.1} parent=1 // pred_fallthru
      _
    // Predicated region
    $region62: #{tpu_custom_call.1} parent=1 // pred_check
      _
    $region63: #{tpu_custom_call.1} parent=1 // pred_check_branch
      %1483 = sbr.rel (0) target = $region65
    $region64: #{tpu_custom_call.1} parent=1 // pred_region
      _
    $region65: #{tpu_custom_call.1} parent=1 // pred_fallthru
      _
    %1484 = vsyncpa [#allocation3], 1
    %1485 = vsyncpa [#allocation5], 1
    %1486 = vsyncpa [#allocation8], 1

</llo_original>
